<compile_context>
chip_gen: v5e
topology: v5e:2x2
jax: 0.10.0
libtpu: 0.0.40
codegen_flags: <defaults>
</compile_context>

<pallas_src>
import functools

import jax
import jax.numpy as jnp
from jax import lax
from jax.experimental import pallas as pl
from jax.experimental.pallas import tpu as pltpu

_LANE = 128


def _round_up(a, b):
    return (a + b - 1) // b * b


def _act(x, act):
    if act == "leaky":
        return jnp.where(x >= 0, x, x * jnp.asarray(0.2, x.dtype))
    if act == "relu":
        return jnp.maximum(x, 0)
    return x


@functools.lru_cache(maxsize=1)
def _vmem_capacity_bytes():
    try:
        info_fn = getattr(pltpu, "get_tpu_info", None)
        if info_fn is not None:
            cap = getattr(info_fn(), "vmem_capacity_bytes", None)
            if cap:
                return int(cap)
    except Exception:
        pass
    return 64 * 1024 * 1024  # conservative (v7x-sized) fallback


# ---------------------------------------------------------------------------
# Pallas kernels:  out = (act(X) @ W + b).astype(out_dtype)
#   X, W are bf16 (MXU-native); b is the combined (conv_bias*bn_scale +
#   bn_shift) vector with the BN scale already folded into W.
# ---------------------------------------------------------------------------
def _matmul_kernel_single(x_ref, w_ref, b_ref, o_ref, *, act):
    # Single K block: no accumulator scratch, no pl.when branches.
    x = _act(x_ref[...], act)
    y = jnp.dot(x, w_ref[...], preferred_element_type=jnp.float32)
    o_ref[...] = (y + b_ref[...]).astype(o_ref.dtype)


def _matmul_kernel_acc(x_ref, w_ref, b_ref, o_ref, acc_ref, *, act):
    @pl.when(pl.program_id(2) == 0)
    def _init():
        acc_ref[...] = jnp.zeros_like(acc_ref)

    x = _act(x_ref[...], act)
    acc_ref[...] += jnp.dot(x, w_ref[...], preferred_element_type=jnp.float32)

    @pl.when(pl.program_id(2) == pl.num_programs(2) - 1)
    def _finalize():
        o_ref[...] = (acc_ref[...] + b_ref[...]).astype(o_ref.dtype)


def fused_matmul(x, w, bias, *, act, out_dtype):
    """(act(x) @ w + bias) with bf16 MXU compute and f32 accumulation."""
    M, K = x.shape
    Kw, C = w.shape
    assert K == Kw
    assert act in ("none", "relu", "leaky")

    x = x.astype(jnp.bfloat16)
    w = w.astype(jnp.bfloat16)
    b = bias.astype(jnp.float32)

    if M < 128:
        # Tiny inner UNet levels: pallas_call launch / pipeline prologue cost
        # dwarfs a single sub-tile of work -> plain XLA dot (still bf16/f32).
        y = jnp.dot(_act(x, act), w, preferred_element_type=jnp.float32)
        return (y + b[None, :]).astype(out_dtype)

    # Lane-dense output stores: pad output channels to a multiple of 128
    # (zero weight/bias columns, sliced off after the kernel).
    Cp = _round_up(C, _LANE)
    if Cp != C:
        w = jnp.pad(w, ((0, 0), (0, Cp - C)))
        b = jnp.pad(b, ((0, Cp - C),))

    cap = _vmem_capacity_bytes()
    big_vmem = cap >= 96 * 1024 * 1024            # v5e / v6e: 128 MiB physical
    max_tm = 1024 if big_vmem else 512
    max_tk = 4096 if big_vmem else 2048

    # Output-channel tile: full width when narrow (avoids re-reading x across
    # N blocks when K is also tiled); 256/128 for the wide convT outputs so
    # the weight tile + accumulator stay bounded on 64 MiB (v7x) VMEM.
    if Cp <= 512:
        TN = Cp
    elif Cp % 256 == 0:
        TN = 256
    else:
        TN = _LANE

    # M tile: a divisor of M (no pad copy), preferring >= 2 blocks so the
    # "parallel" M axis can be sharded across v7x's two TensorCores.
    tm_cands = [t for t in (1024, 512, 256, 128, 64, 32, 16, 8) if t <= max_tm]
    TM = next((t for t in tm_cands if M % t == 0 and M // t >= 2), None)
    if TM is None:
        TM = next((t for t in tm_cands if M % t == 0), None)
    Mp = M
    if TM is None:                                # ragged M (rare): pad
        Mp = _round_up(M, 8)
        x = jnp.pad(x, ((0, Mp - M), (0, 0)))
        TM = next(t for t in tm_cands if Mp % t == 0)

    # K tile: full K when it fits, else the largest 128-multiple divisor
    # (never pads K).
    if K <= max_tk:
        TK = K
    else:
        TK = next((t for t in (4096, 2048, 1024, 512, 256, 128)
                   if t <= max_tk and K % t == 0), K)
    nk = K // TK

    # Explicit VMEM budget: double-buffered in/out tiles + f32 accumulator.
    out_bytes = jnp.dtype(out_dtype).itemsize
    footprint = (2 * TM * TK * 2 + 2 * TK * TN * 2 + 2 * TM * TN * out_bytes
                 + 2 * TN * 4 + (TM * TN * 4 if nk > 1 else 0))
    vmem_limit = int(min(max(2 * footprint, 32 * 1024 * 1024), cap * 3 // 4))

    nm, nn = Mp // TM, Cp // TN
    b2 = b.reshape(1, Cp)

    if nk == 1:
        out = pl.pallas_call(
            functools.partial(_matmul_kernel_single, act=act),
            out_shape=jax.ShapeDtypeStruct((Mp, Cp), out_dtype),
            grid=(nm, nn),
            in_specs=[
                pl.BlockSpec((TM, K), lambda i, j: (i, 0)),
                pl.BlockSpec((K, TN), lambda i, j: (0, j)),
                pl.BlockSpec((1, TN), lambda i, j: (0, j)),
            ],
            out_specs=pl.BlockSpec((TM, TN), lambda i, j: (i, j)),
            compiler_params=pltpu.CompilerParams(
                dimension_semantics=("parallel", "parallel"),
                vmem_limit_bytes=vmem_limit,
            ),
        )(x, w, b2)
    else:
        out = pl.pallas_call(
            functools.partial(_matmul_kernel_acc, act=act),
            out_shape=jax.ShapeDtypeStruct((Mp, Cp), out_dtype),
            grid=(nm, nn, nk),
            in_specs=[
                pl.BlockSpec((TM, TK), lambda i, j, k: (i, k)),
                pl.BlockSpec((TK, TN), lambda i, j, k: (k, j)),
                pl.BlockSpec((1, TN), lambda i, j, k: (0, j)),
            ],
            out_specs=pl.BlockSpec((TM, TN), lambda i, j, k: (i, j)),
            scratch_shapes=[pltpu.VMEM((TM, TN), jnp.float32)],
            compiler_params=pltpu.CompilerParams(
                dimension_semantics=("parallel", "parallel", "arbitrary"),
                vmem_limit_bytes=vmem_limit,
            ),
        )(x, w, b2)

    if Mp != M or Cp != C:
        out = out[:M, :C]
    return out


# ---------------------------------------------------------------------------
# Conv2d(k=4, s=2, p=1): activation in XLA (exact module semantics), im2col
# (bf16, built once in XLA), fused matmul kernel.
# TODO(synk): fuse the im2col: space-to-depth of the padded input + per-tap
#             accumulation with a halo'd manual DMA, to avoid materializing the
#             4x-duplicated patch matrix in HBM (down path is HBM-bound).
# ---------------------------------------------------------------------------
def _im2col_4x4_s2(xpad, OH, OW):
    N, _, _, C = xpad.shape
    cols = []
    for kh in range(4):
        for kw in range(4):
            cols.append(xpad[:, kh:kh + 2 * OH:2, kw:kw + 2 * OW:2, :])
    p = jnp.stack(cols, axis=3)                        # (N, OH, OW, 16, C)
    return p.reshape(N * OH * OW, 16 * C)


def conv4s2p1(x, w_mat, bias, act):
    """x: NHWC bf16; w_mat: (16*Cin, Cout) bf16 (BN scale folded); bias f32."""
    N, H, W, Cin = x.shape
    Cout = w_mat.shape[1]
    OH, OW = H // 2, W // 2
    if act != "none":
        x = _act(x, act)                               # pre-conv activation (XLA)
    xpad = jnp.pad(x, ((0, 0), (1, 1), (1, 1), (0, 0)))
    patches = _im2col_4x4_s2(xpad, OH, OW)
    y = fused_matmul(patches, w_mat, bias, act="none", out_dtype=jnp.bfloat16)
    return y.reshape(N, OH, OW, Cout)


# ---------------------------------------------------------------------------
# ConvTranspose2d(k=4, s=2, p=1): single matmul  x @ W(Cin, 16*Cout)  (ReLU
# fused in-kernel), then a scatter-free col2im (output-parity phase
# interleave).  Bias + cast are applied per phase so the interleave moves
# out_dtype (bf16 interior), not f32, and there is no 6-D f32 transpose.
# ---------------------------------------------------------------------------
def convT4s2p1(x, w_mat, bias, out_dtype):
    """x: NHWC bf16; w_mat: (Cin, 16*Cout) bf16 (taps (ky,kx)-major, BN scale
    folded); bias: (Cout,) f32 = conv_bias*scale + shift (added post-col2im)."""
    N, H, W, Cin = x.shape
    C16 = w_mat.shape[1]
    Cout = C16 // 16
    xm = x.reshape(N * H * W, Cin)
    y = fused_matmul(xm, w_mat, jnp.zeros((C16,), jnp.float32),
                     act="relu", out_dtype=jnp.bfloat16)
    y = y.reshape(N, H, W, 4, 4, Cout)
    yp = jnp.pad(y, ((0, 0), (1, 1), (1, 1), (0, 0), (0, 0), (0, 0)))

    # Output pixel (2m+ry, 2n+cx) receives exactly 4 taps (fewer on the border,
    # handled by the zero padding of y):
    #   ry=0: (y[m], ky=1), (y[m-1], ky=3);   ry=1: (y[m+1], ky=0), (y[m], ky=2)
    # (offsets below index yp, which is y padded by one on each spatial side).
    taps = {0: ((1, 1), (0, 3)), 1: ((2, 0), (1, 2))}
    bias_b = bias.reshape(1, 1, 1, Cout).astype(jnp.float32)
    row_phases = []
    for ry in (0, 1):
        col_phases = []
        for cx in (0, 1):
            acc = jnp.zeros((N, H, W, Cout), jnp.float32)
            for oy, ky in taps[ry]:
                for ox, kx in taps[cx]:
                    acc = acc + yp[:, oy:oy + H, ox:ox + W, ky, kx, :].astype(jnp.float32)
            col_phases.append((acc + bias_b).astype(out_dtype))
        row_phases.append(jnp.stack(col_phases, axis=3))   # (N, H, W, 2, Cout)
    out = jnp.stack(row_phases, axis=2)                    # (N, H, 2, W, 2, Cout)
    return out.reshape(N, 2 * H, 2 * W, Cout)


# ---------------------------------------------------------------------------
# Deterministic parameter construction (synthetic, torch layouts), then a
# one-time prep step: fold eval-mode BatchNorm into weights, combine biases,
# pre-transpose to matmul layout, cast to bf16.
# TODO(synk): training-mode BatchNorm (batch statistics) is not reproduced.
# ---------------------------------------------------------------------------
def _init_bn(key, c):
    k1, k2, k3, k4 = jax.random.split(key, 4)
    gamma = jax.random.uniform(k1, (c,), jnp.float32, 0.5, 1.5)
    beta = 0.1 * jax.random.normal(k2, (c,), jnp.float32)
    mean = 0.1 * jax.random.normal(k3, (c,), jnp.float32)
    var = jax.random.uniform(k4, (c,), jnp.float32, 0.5, 1.5)
    scale = gamma / jnp.sqrt(var + 1e-5)
    shift = beta - mean * scale
    return scale, shift


def _init_conv(key, cout, cin):
    return 0.05 * jax.random.normal(key, (cout, cin, 4, 4), jnp.float32)


def _init_convT(key, cin, cout):
    return 0.05 * jax.random.normal(key, (cin, cout, 4, 4), jnp.float32)


def build_unet_params(key, input_nc, output_nc, num_downs, ngf):
    keys = iter(jax.random.split(key, 256))

    def innermost(outer_nc, inner_nc):
        return dict(kind="innermost",
                    down_w=_init_conv(next(keys), inner_nc, outer_nc),
                    up_w=_init_convT(next(keys), inner_nc, outer_nc),
                    up_bn=_init_bn(next(keys), outer_nc))

    def middle(outer_nc, inner_nc, sub):
        return dict(kind="middle",
                    down_w=_init_conv(next(keys), inner_nc, outer_nc),
                    down_bn=_init_bn(next(keys), inner_nc),
                    up_w=_init_convT(next(keys), inner_nc * 2, outer_nc),
                    up_bn=_init_bn(next(keys), outer_nc),
                    sub=sub)

    def outermost(outer_nc, inner_nc, in_nc, sub):
        return dict(kind="outermost",
                    down_w=_init_conv(next(keys), inner_nc, in_nc),
                    up_w=_init_convT(next(keys), inner_nc * 2, outer_nc),
                    up_b=0.05 * jax.random.normal(next(keys), (outer_nc,), jnp.float32),
                    sub=sub)

    block = innermost(ngf * 8, ngf * 8)
    for _ in range(num_downs - 5):
        block = middle(ngf * 8, ngf * 8, block)
    block = middle(ngf * 4, ngf * 8, block)
    block = middle(ngf * 2, ngf * 4, block)
    block = middle(ngf, ngf * 2, block)
    block = outermost(output_nc, ngf, input_nc, block)
    return block


def _prep_conv_w(w, scale):
    # torch (Cout, Cin, 4, 4) -> (16*Cin, Cout), tap (kh,kw)-major, BN folded.
    cout, cin = w.shape[0], w.shape[1]
    wf = jnp.transpose(w, (2, 3, 1, 0)).reshape(16 * cin, cout)
    return (wf * scale[None, :]).astype(jnp.bfloat16)


def _prep_convT_w(w, scale):
    # torch (Cin, Cout, 4, 4) -> (Cin, 16*Cout), columns ordered ((ky,kx), co).
    cin, cout = w.shape[0], w.shape[1]
    ws = w * scale[None, :, None, None]
    wm = jnp.transpose(ws, (0, 2, 3, 1)).reshape(cin, 16 * cout)
    return wm.astype(jnp.bfloat16)


def prepare_unet_params(p):
    kind = p["kind"]
    if kind == "outermost":
        inner_nc = p["down_w"].shape[0]
        outer_nc = p["up_w"].shape[1]
        return dict(kind="outermost",
                    down_wm=_prep_conv_w(p["down_w"], jnp.ones((inner_nc,), jnp.float32)),
                    down_b=jnp.zeros((inner_nc,), jnp.float32),
                    up_wm=_prep_convT_w(p["up_w"], jnp.ones((outer_nc,), jnp.float32)),
                    up_b=p["up_b"].astype(jnp.float32),
                    sub=prepare_unet_params(p["sub"]))
    if kind == "innermost":
        inner_nc = p["down_w"].shape[0]
        usc, ush = p["up_bn"]
        return dict(kind="innermost",
                    down_wm=_prep_conv_w(p["down_w"], jnp.ones((inner_nc,), jnp.float32)),
                    down_b=jnp.zeros((inner_nc,), jnp.float32),
                    up_wm=_prep_convT_w(p["up_w"], usc),
                    up_b=ush.astype(jnp.float32))
    dsc, dsh = p["down_bn"]
    usc, ush = p["up_bn"]
    return dict(kind="middle",
                down_wm=_prep_conv_w(p["down_w"], dsc),
                down_b=dsh.astype(jnp.float32),
                up_wm=_prep_convT_w(p["up_w"], usc),
                up_b=ush.astype(jnp.float32),
                sub=prepare_unet_params(p["sub"]))


# ---------------------------------------------------------------------------
# Forward (mirrors UnetSkipConnectionBlock.forward semantics exactly).
# ---------------------------------------------------------------------------
def block_forward(p, x):
    kind = p["kind"]
    if kind == "outermost":
        # down = [downconv] (no bias, no activation, no norm)
        d = conv4s2p1(x, p["down_wm"], p["down_b"], act="none")
        s = block_forward(p["sub"], d)
        # up = [ReLU, upconv(bias=True)]  (no norm, no skip concat)
        return convT4s2p1(s, p["up_wm"], p["up_b"], out_dtype=jnp.float32)
    # down = [LeakyReLU(0.2), downconv(, BN folded into weights/bias)]
    d = conv4s2p1(x, p["down_wm"], p["down_b"], act="leaky")
    if kind == "innermost":
        u = convT4s2p1(d, p["up_wm"], p["up_b"], out_dtype=x.dtype)
    else:
        s = block_forward(p["sub"], d)
        u = convT4s2p1(s, p["up_wm"], p["up_b"], out_dtype=x.dtype)
    # TODO(synk): write `u` directly into a preallocated concat slab via
    #             input_output_aliases to avoid re-copying the skip tensor x.
    return jnp.concatenate([x, u], axis=-1)


def unet_forward(params, x_nchw):
    x = jnp.transpose(x_nchw, (0, 2, 3, 1)).astype(jnp.bfloat16)  # NCHW -> NHWC
    y = block_forward(params, x)
    return jnp.transpose(y, (0, 3, 1, 2))                         # NHWC -> NCHW


# ---------------------------------------------------------------------------
# Pure-JAX reference (lax.conv_general_dilated), mirrors the torch module.
# ---------------------------------------------------------------------------
def _ref_conv_down(x, w, bn, act):
    if act == "leaky":
        x = jnp.where(x >= 0, x, 0.2 * x)
    rhs = jnp.transpose(w, (2, 3, 1, 0))                          # (kh,kw,Cin,Cout)
    y = lax.conv_general_dilated(x, rhs, window_strides=(2, 2),
                                 padding=((1, 1), (1, 1)),
                                 dimension_numbers=("NHWC", "HWIO", "NHWC"))
    if bn is not None:
        sc, sh = bn
        y = y * sc + sh
    return y


def _ref_convT_up(x, w, bias, bn):
    x = jnp.maximum(x, 0)
    rhs = jnp.transpose(w[:, :, ::-1, ::-1], (2, 3, 0, 1))        # flipped, HWIO
    y = lax.conv_general_dilated(x, rhs, window_strides=(1, 1),
                                 padding=((2, 2), (2, 2)),
                                 lhs_dilation=(2, 2),
                                 dimension_numbers=("NHWC", "HWIO", "NHWC"))
    if bias is not None:
        y = y + bias
    if bn is not None:
        sc, sh = bn
        y = y * sc + sh
    return y


def ref_block_forward(p, x):
    kind = p["kind"]
    if kind == "outermost":
        d = _ref_conv_down(x, p["down_w"], None, act="none")
        s = ref_block_forward(p["sub"], d)
        return _ref_convT_up(s, p["up_w"], p["up_b"], None)
    d = _ref_conv_down(x, p["down_w"], p.get("down_bn"), act="leaky")
    if kind == "innermost":
        u = _ref_convT_up(d, p["up_w"], None, p["up_bn"])
    else:
        s = ref_block_forward(p["sub"], d)
        u = _ref_convT_up(s, p["up_w"], None, p["up_bn"])
    return jnp.concatenate([x, u], axis=-1)


def ref_unet_forward(raw_params, x_nchw):
    x = jnp.transpose(x_nchw, (0, 2, 3, 1)).astype(jnp.float32)
    y = ref_block_forward(raw_params, x)
    return jnp.transpose(y, (0, 3, 1, 2))


if __name__ == "__main__":
    key = jax.random.PRNGKey(0)
    kp, kx = jax.random.split(key)

    input_nc, output_nc, num_downs, ngf = 3, 3, 5, 8
    raw_params = build_unet_params(kp, input_nc, output_nc, num_downs, ngf)
    params = prepare_unet_params(raw_params)   # one-time fold/transpose/bf16

    # NCHW input, spatial = 2**num_downs so the innermost level is 1x1.
    x = jax.random.normal(kx, (2, input_nc, 32, 32), jnp.float32)

    fwd = jax.jit(lambda inp: unet_forward(params, inp))
    y = jax.block_until_ready(fwd(x))
    assert y.shape == (2, output_nc, 32, 32), y.shape
    assert y.dtype == jnp.float32
    assert bool(jnp.all(jnp.isfinite(y)))

    # Numerical check against a pure-JAX (lax.conv) reference of the module.
    y_ref = jax.block_until_ready(jax.jit(lambda inp: ref_unet_forward(raw_params, inp))(x))
    ok = bool(jnp.allclose(y, y_ref, rtol=0.1, atol=0.1))
    assert ok, f"kernel/reference mismatch: max_abs_err={float(jnp.max(jnp.abs(y - y_ref)))}"

    print("KERNEL_OK")
</pallas_src>

<mosaic_0001>
module attributes {stable_mosaic.version = 11 : i64} {
  func.func @_matmul_kernel_single(%arg0: i32, %arg1: i32, %arg2: memref<256x48xbf16, #tpu.memory_space<vmem>>, %arg3: memref<48x128xbf16, #tpu.memory_space<vmem>>, %arg4: memref<1x128xf32, #tpu.memory_space<vmem>>, %arg5: memref<256x128xbf16, #tpu.memory_space<vmem>>) attributes {dimension_semantics = [#tpu.dimension_semantics<parallel>, #tpu.dimension_semantics<parallel>], iteration_bounds = array<i64: 2, 1>, scalar_prefetch = 0 : i64, scratch_operands = 0 : i64, tpu.core_type = #tpu.core_type<tc>, window_params = [{transform_indices = @transform_0, window_bounds = array<i64: 256, 48>}, {transform_indices = @transform_1, window_bounds = array<i64: 48, 128>}, {transform_indices = @transform_2, window_bounds = array<i64: 1, 128>}, {transform_indices = @transform_3, window_bounds = array<i64: 256, 128>}]} {
    %c0 = arith.constant 0 : index
    %c0_0 = arith.constant 0 : index
    %0 = vector.load %arg2[%c0, %c0_0] : memref<256x48xbf16, #tpu.memory_space<vmem>>, vector<256x48xbf16>
    %c0_1 = arith.constant 0 : index
    %c0_2 = arith.constant 0 : index
    %1 = vector.load %arg3[%c0_1, %c0_2] : memref<48x128xbf16, #tpu.memory_space<vmem>>, vector<48x128xbf16>
    %cst = arith.constant dense<0.000000e+00> : vector<256x128xf32>
    %2 = tpu.matmul %0, %1, %cst {dimension_numbers = #tpu.dot_dimension_numbers<[1], [0], [0], [1], [0, 0, 1, 1], [], []>} : vector<256x48xbf16>, vector<48x128xbf16>, vector<256x128xf32> -> vector<256x128xf32>
    %c0_3 = arith.constant 0 : index
    %c0_4 = arith.constant 0 : index
    %3 = vector.load %arg4[%c0_3, %c0_4] : memref<1x128xf32, #tpu.memory_space<vmem>>, vector<1x128xf32>
    %4 = vector.broadcast %3 : vector<1x128xf32> to vector<256x128xf32>
    %5 = arith.addf %2, %4 : vector<256x128xf32>
    %6 = arith.truncf %5 : vector<256x128xf32> to vector<256x128xbf16>
    %c0_5 = arith.constant 0 : index
    %c0_6 = arith.constant 0 : index
    %7 = vector.load %arg5[%c0_5, %c0_6] : memref<256x128xbf16, #tpu.memory_space<vmem>>, vector<256x128xbf16>
    tpu.vector_store %arg5[%c0_5, %c0_6], %6 {strides = array<i32>} : memref<256x128xbf16, #tpu.memory_space<vmem>>, vector<256x128xbf16>,
    return
  }
  func.func @transform_0(%arg0: i32, %arg1: i32) -> (i32, i32) {
    %c0_i32 = arith.constant 0 : i32
    %c0_i32_0 = arith.constant 0 : i32
    return %arg0, %c0_i32 : i32, i32
  }
  func.func @transform_1(%arg0: i32, %arg1: i32) -> (i32, i32) {
    %c0_i32 = arith.constant 0 : i32
    %c0_i32_0 = arith.constant 0 : i32
    return %c0_i32, %arg1 : i32, i32
  }
  func.func @transform_2(%arg0: i32, %arg1: i32) -> (i32, i32) {
    %c0_i32 = arith.constant 0 : i32
    %c0_i32_0 = arith.constant 0 : i32
    return %c0_i32, %arg1 : i32, i32
  }
  func.func @transform_3(%arg0: i32, %arg1: i32) -> (i32, i32) {
    %c0_i32 = arith.constant 0 : i32
    return %arg0, %arg1 : i32, i32
  }
}

module attributes {stable_mosaic.version = 11 : i64} {
  func.func @_matmul_kernel_single(%arg0: i32, %arg1: i32, %arg2: memref<64x128xbf16, #tpu.memory_space<vmem>>, %arg3: memref<128x128xbf16, #tpu.memory_space<vmem>>, %arg4: memref<1x128xf32, #tpu.memory_space<vmem>>, %arg5: memref<64x128xbf16, #tpu.memory_space<vmem>>) attributes {dimension_semantics = [#tpu.dimension_semantics<parallel>, #tpu.dimension_semantics<parallel>], iteration_bounds = array<i64: 2, 1>, scalar_prefetch = 0 : i64, scratch_operands = 0 : i64, tpu.core_type = #tpu.core_type<tc>, window_params = [{transform_indices = @transform_0, window_bounds = array<i64: 64, 128>}, {transform_indices = @transform_1, window_bounds = array<i64: 128, 128>}, {transform_indices = @transform_2, window_bounds = array<i64: 1, 128>}, {transform_indices = @transform_3, window_bounds = array<i64: 64, 128>}]} {
    %c0 = arith.constant 0 : index
    %c0_0 = arith.constant 0 : index
    %0 = vector.load %arg2[%c0, %c0_0] : memref<64x128xbf16, #tpu.memory_space<vmem>>, vector<64x128xbf16>
    %c0_1 = arith.constant 0 : index
    %c0_2 = arith.constant 0 : index
    %1 = vector.load %arg3[%c0_1, %c0_2] : memref<128x128xbf16, #tpu.memory_space<vmem>>, vector<128x128xbf16>
    %cst = arith.constant dense<0.000000e+00> : vector<64x128xf32>
    %2 = tpu.matmul %0, %1, %cst {dimension_numbers = #tpu.dot_dimension_numbers<[1], [0], [0], [1], [0, 0, 1, 1], [], []>} : vector<64x128xbf16>, vector<128x128xbf16>, vector<64x128xf32> -> vector<64x128xf32>
    %c0_3 = arith.constant 0 : index
    %c0_4 = arith.constant 0 : index
    %3 = vector.load %arg4[%c0_3, %c0_4] : memref<1x128xf32, #tpu.memory_space<vmem>>, vector<1x128xf32>
    %4 = vector.broadcast %3 : vector<1x128xf32> to vector<64x128xf32>
    %5 = arith.addf %2, %4 : vector<64x128xf32>
    %6 = arith.truncf %5 : vector<64x128xf32> to vector<64x128xbf16>
    %c0_5 = arith.constant 0 : index
    %c0_6 = arith.constant 0 : index
    %7 = vector.load %arg5[%c0_5, %c0_6] : memref<64x128xbf16, #tpu.memory_space<vmem>>, vector<64x128xbf16>
    tpu.vector_store %arg5[%c0_5, %c0_6], %6 {strides = array<i32>} : memref<64x128xbf16, #tpu.memory_space<vmem>>, vector<64x128xbf16>,
    return
  }
  func.func @transform_0(%arg0: i32, %arg1: i32) -> (i32, i32) {
    %c0_i32 = arith.constant 0 : i32
    %c0_i32_0 = arith.constant 0 : i32
    return %arg0, %c0_i32 : i32, i32
  }
  func.func @transform_1(%arg0: i32, %arg1: i32) -> (i32, i32) {
    %c0_i32 = arith.constant 0 : i32
    %c0_i32_0 = arith.constant 0 : i32
    return %c0_i32, %arg1 : i32, i32
  }
  func.func @transform_2(%arg0: i32, %arg1: i32) -> (i32, i32) {
    %c0_i32 = arith.constant 0 : i32
    %c0_i32_0 = arith.constant 0 : i32
    return %c0_i32, %arg1 : i32, i32
  }
  func.func @transform_3(%arg0: i32, %arg1: i32) -> (i32, i32) {
    %c0_i32 = arith.constant 0 : i32
    return %arg0, %arg1 : i32, i32
  }
}

module attributes {stable_mosaic.version = 11 : i64} {
  func.func @_matmul_kernel_single(%arg0: i32, %arg1: i32, %arg2: memref<64x32xbf16, #tpu.memory_space<vmem>>, %arg3: memref<32x128xbf16, #tpu.memory_space<vmem>>, %arg4: memref<1x128xf32, #tpu.memory_space<vmem>>, %arg5: memref<64x128xbf16, #tpu.memory_space<vmem>>) attributes {dimension_semantics = [#tpu.dimension_semantics<parallel>, #tpu.dimension_semantics<parallel>], iteration_bounds = array<i64: 2, 1>, scalar_prefetch = 0 : i64, scratch_operands = 0 : i64, tpu.core_type = #tpu.core_type<tc>, window_params = [{transform_indices = @transform_0, window_bounds = array<i64: 64, 32>}, {transform_indices = @transform_1, window_bounds = array<i64: 32, 128>}, {transform_indices = @transform_2, window_bounds = array<i64: 1, 128>}, {transform_indices = @transform_3, window_bounds = array<i64: 64, 128>}]} {
    %c0 = arith.constant 0 : index
    %c0_0 = arith.constant 0 : index
    %0 = vector.load %arg2[%c0, %c0_0] : memref<64x32xbf16, #tpu.memory_space<vmem>>, vector<64x32xbf16>
    %cst = arith.constant 0.000000e+00 : bf16
    %1 = vector.broadcast %cst : bf16 to vector<64x32xbf16>
    %2 = arith.maximumf %0, %1 : vector<64x32xbf16>
    %c0_1 = arith.constant 0 : index
    %c0_2 = arith.constant 0 : index
    %3 = vector.load %arg3[%c0_1, %c0_2] : memref<32x128xbf16, #tpu.memory_space<vmem>>, vector<32x128xbf16>
    %cst_3 = arith.constant dense<0.000000e+00> : vector<64x128xf32>
    %4 = tpu.matmul %2, %3, %cst_3 {dimension_numbers = #tpu.dot_dimension_numbers<[1], [0], [0], [1], [0, 0, 1, 1], [], []>} : vector<64x32xbf16>, vector<32x128xbf16>, vector<64x128xf32> -> vector<64x128xf32>
    %c0_4 = arith.constant 0 : index
    %c0_5 = arith.constant 0 : index
    %5 = vector.load %arg4[%c0_4, %c0_5] : memref<1x128xf32, #tpu.memory_space<vmem>>, vector<1x128xf32>
    %6 = vector.broadcast %5 : vector<1x128xf32> to vector<64x128xf32>
    %7 = arith.addf %4, %6 : vector<64x128xf32>
    %8 = arith.truncf %7 : vector<64x128xf32> to vector<64x128xbf16>
    %c0_6 = arith.constant 0 : index
    %c0_7 = arith.constant 0 : index
    %9 = vector.load %arg5[%c0_6, %c0_7] : memref<64x128xbf16, #tpu.memory_space<vmem>>, vector<64x128xbf16>
    tpu.vector_store %arg5[%c0_6, %c0_7], %8 {strides = array<i32>} : memref<64x128xbf16, #tpu.memory_space<vmem>>, vector<64x128xbf16>,
    return
  }
  func.func @transform_0(%arg0: i32, %arg1: i32) -> (i32, i32) {
    %c0_i32 = arith.constant 0 : i32
    %c0_i32_0 = arith.constant 0 : i32
    return %arg0, %c0_i32 : i32, i32
  }
  func.func @transform_1(%arg0: i32, %arg1: i32) -> (i32, i32) {
    %c0_i32 = arith.constant 0 : i32
    %c0_i32_0 = arith.constant 0 : i32
    return %c0_i32, %arg1 : i32, i32
  }
  func.func @transform_2(%arg0: i32, %arg1: i32) -> (i32, i32) {
    %c0_i32 = arith.constant 0 : i32
    %c0_i32_0 = arith.constant 0 : i32
    return %c0_i32, %arg1 : i32, i32
  }
  func.func @transform_3(%arg0: i32, %arg1: i32) -> (i32, i32) {
    %c0_i32 = arith.constant 0 : i32
    return %arg0, %arg1 : i32, i32
  }
}

module attributes {stable_mosaic.version = 11 : i64} {
  func.func @_matmul_kernel_single(%arg0: i32, %arg1: i32, %arg2: memref<256x16xbf16, #tpu.memory_space<vmem>>, %arg3: memref<16x128xbf16, #tpu.memory_space<vmem>>, %arg4: memref<1x128xf32, #tpu.memory_space<vmem>>, %arg5: memref<256x128xbf16, #tpu.memory_space<vmem>>) attributes {dimension_semantics = [#tpu.dimension_semantics<parallel>, #tpu.dimension_semantics<parallel>], iteration_bounds = array<i64: 2, 1>, scalar_prefetch = 0 : i64, scratch_operands = 0 : i64, tpu.core_type = #tpu.core_type<tc>, window_params = [{transform_indices = @transform_0, window_bounds = array<i64: 256, 16>}, {transform_indices = @transform_1, window_bounds = array<i64: 16, 128>}, {transform_indices = @transform_2, window_bounds = array<i64: 1, 128>}, {transform_indices = @transform_3, window_bounds = array<i64: 256, 128>}]} {
    %c0 = arith.constant 0 : index
    %c0_0 = arith.constant 0 : index
    %0 = vector.load %arg2[%c0, %c0_0] : memref<256x16xbf16, #tpu.memory_space<vmem>>, vector<256x16xbf16>
    %cst = arith.constant 0.000000e+00 : bf16
    %1 = vector.broadcast %cst : bf16 to vector<256x16xbf16>
    %2 = arith.maximumf %0, %1 : vector<256x16xbf16>
    %c0_1 = arith.constant 0 : index
    %c0_2 = arith.constant 0 : index
    %3 = vector.load %arg3[%c0_1, %c0_2] : memref<16x128xbf16, #tpu.memory_space<vmem>>, vector<16x128xbf16>
    %cst_3 = arith.constant dense<0.000000e+00> : vector<256x128xf32>
    %4 = tpu.matmul %2, %3, %cst_3 {dimension_numbers = #tpu.dot_dimension_numbers<[1], [0], [0], [1], [0, 0, 1, 1], [], []>} : vector<256x16xbf16>, vector<16x128xbf16>, vector<256x128xf32> -> vector<256x128xf32>
    %c0_4 = arith.constant 0 : index
    %c0_5 = arith.constant 0 : index
    %5 = vector.load %arg4[%c0_4, %c0_5] : memref<1x128xf32, #tpu.memory_space<vmem>>, vector<1x128xf32>
    %6 = vector.broadcast %5 : vector<1x128xf32> to vector<256x128xf32>
    %7 = arith.addf %4, %6 : vector<256x128xf32>
    %8 = arith.truncf %7 : vector<256x128xf32> to vector<256x128xbf16>
    %c0_6 = arith.constant 0 : index
    %c0_7 = arith.constant 0 : index
    %9 = vector.load %arg5[%c0_6, %c0_7] : memref<256x128xbf16, #tpu.memory_space<vmem>>, vector<256x128xbf16>
    tpu.vector_store %arg5[%c0_6, %c0_7], %8 {strides = array<i32>} : memref<256x128xbf16, #tpu.memory_space<vmem>>, vector<256x128xbf16>,
    return
  }
  func.func @transform_0(%arg0: i32, %arg1: i32) -> (i32, i32) {
    %c0_i32 = arith.constant 0 : i32
    %c0_i32_0 = arith.constant 0 : i32
    return %arg0, %c0_i32 : i32, i32
  }
  func.func @transform_1(%arg0: i32, %arg1: i32) -> (i32, i32) {
    %c0_i32 = arith.constant 0 : i32
    %c0_i32_0 = arith.constant 0 : i32
    return %c0_i32, %arg1 : i32, i32
  }
  func.func @transform_2(%arg0: i32, %arg1: i32) -> (i32, i32) {
    %c0_i32 = arith.constant 0 : i32
    %c0_i32_0 = arith.constant 0 : i32
    return %c0_i32, %arg1 : i32, i32
  }
  func.func @transform_3(%arg0: i32, %arg1: i32) -> (i32, i32) {
    %c0_i32 = arith.constant 0 : i32
    return %arg0, %arg1 : i32, i32
  }
}

</mosaic_0001>

<llo_original>
// kernel: _lambda_.4
$region0: #{_lambda_.4}
  #allocation0 [shape = 'u32[]', space=smem, size = 0x4, offset = 0x4, fixed_abs, tag = 'smem constant byte address 0x4 - core index']
  #allocation1 [shape = 'u32[72,128]{1,0:T(1,128)}', space=vmem, size = 0x9000, scoped, tag = 'internal scratch']
  %s0 = inlined_call_operand.vmem [shape: bf16[512,48], index: 0, kind: input, shape index: {}]
  %s1 = inlined_call_operand.vmem [shape: bf16[48,128], index: 1, kind: input, shape index: {}]
  %s2 = inlined_call_operand.vmem [shape: f32[1,128], index: 2, kind: input, shape index: {}]
  %s3 = inlined_call_operand.vmem [shape: bf16[512,128], index: 3, kind: output, shape index: {}]
  %s4 = sld [smem:[#allocation0]]
  $region45: #{_lambda_.4} parent=0
    _
  %s6 = ssub.s32 1, %s4
  %s7 = scalar_select 0, %s6, %s4
  loop: start=0, step=1, limit=4
  $region2: #{_lambda_.4} parent=0 // loop_pre_header
    _
  $region3: #{_lambda_.4} parent=0 // loop_header
    %s9 = sphi 0, %s13
    %p10 = scmp.ge.s32.totalorder %s9, 4
    %s16 = sphi 0, %s28
    %s17 = sphi 0, %s24
    %s18 = sphi 0, %s16
    %s19 = sphi 0, %s17
    %s20 = sphi 0, %s18
    %s21 = sphi 0, %s19
    %s31 = sphi 0, %s33
    %s34 = sphi 0, %s31
    %s35 = sphi 0, %s34
    %s51 = sphi 0, %s35
    %s57 = sphi 0, %s59
    %s60 = sphi 0, %s57
    %s61 = sphi 0, %s60
    %s77 = sphi 0, %s61
    %s83 = sphi 0, %s85
    %s86 = sphi 0, %s83
    %s87 = sphi 0, %s86
    %s103 = sphi 0, %s87
    %s111 = sphi 0, %s113
    %s114 = sphi 0, %s111
    %s115 = sphi 0, %s114
    %s131 = sphi 0, %s115
  $region4: #{_lambda_.4} parent=0 // loop_header_branch
    %12 = sbr.rel (%p10) target = $region8
  $region5: #{_lambda_.4} parent=0 // loop_body
    %s14 = ssub.s32 %s9, 1
    %s15 = ssub.s32 %s9, 2
    %s22 = sadd.s32 1, %s17
    %p23 = scmp.ge.s32.totalorder %s22, 1
    %s24 = scalar_select %p23, 0, %s22
    %s25 = sadd.s32 1, %s16
    %s26 = scalar_select %p23, %s25, %s16
    %p27 = scmp.ge.s32.totalorder %s26, 2
    %s28 = scalar_select %p27, 0, %s26
    %s29 = ssub.s32 %s16, %s28
    %p30 = scmp.eq.s32.totalorder %s29, 0
    %s32 = sadd.s32 %s31, 1
    %s33 = scalar_select %p30, %s31, %s32
    %p36 = pneg %p30
    %p37 = scmp.eq.s32.totalorder %s9, 1
    %p38 = por %p36, %p37
    %p39 = scmp.ne.s32.totalorder %s31, %s34
    %p40 = scmp.eq.s32.totalorder %s9, 0
    %p41 = por %p39, %p40
    %p42 = scmp.ne.s32.totalorder %s31, %s34
    %p43 = scmp.eq.s32.totalorder %s14, 1
    %p44 = por %p42, %p43
    %p45 = scmp.ne.s32.totalorder %s34, %s35
    %p46 = scmp.eq.s32.totalorder %s14, 0
    %p47 = por %p45, %p46
    %p48 = scmp.ne.s32.totalorder %s34, %s35
    %p49 = scmp.eq.s32.totalorder %s15, 1
    %p50 = por %p48, %p49
    %p52 = scmp.ne.s32.totalorder %s35, %s51
    %p53 = scmp.eq.s32.totalorder %s15, 0
    %p54 = por %p52, %p53
    %s55 = ssub.s32 %s17, %s24
    %p56 = scmp.eq.s32.totalorder %s55, 0
    %s58 = sadd.s32 %s57, 1
    %s59 = scalar_select %p56, %s57, %s58
    %p62 = pneg %p56
    %p63 = scmp.eq.s32.totalorder %s9, 1
    %p64 = por %p62, %p63
    %p65 = scmp.ne.s32.totalorder %s57, %s60
    %p66 = scmp.eq.s32.totalorder %s9, 0
    %p67 = por %p65, %p66
    %p68 = scmp.ne.s32.totalorder %s57, %s60
    %p69 = scmp.eq.s32.totalorder %s14, 1
    %p70 = por %p68, %p69
    %p71 = scmp.ne.s32.totalorder %s60, %s61
    %p72 = scmp.eq.s32.totalorder %s14, 0
    %p73 = por %p71, %p72
    %p74 = scmp.ne.s32.totalorder %s60, %s61
    %p75 = scmp.eq.s32.totalorder %s15, 1
    %p76 = por %p74, %p75
    %p78 = scmp.ne.s32.totalorder %s61, %s77
    %p79 = scmp.eq.s32.totalorder %s15, 0
    %p80 = por %p78, %p79
    %s81 = ssub.s32 %s17, %s24
    %p82 = scmp.eq.s32.totalorder %s81, 0
    %s84 = sadd.s32 %s83, 1
    %s85 = scalar_select %p82, %s83, %s84
    %p88 = pneg %p82
    %p89 = scmp.eq.s32.totalorder %s9, 1
    %p90 = por %p88, %p89
    %p91 = scmp.ne.s32.totalorder %s83, %s86
    %p92 = scmp.eq.s32.totalorder %s9, 0
    %p93 = por %p91, %p92
    %p94 = scmp.ne.s32.totalorder %s83, %s86
    %p95 = scmp.eq.s32.totalorder %s14, 1
    %p96 = por %p94, %p95
    %p97 = scmp.ne.s32.totalorder %s86, %s87
    %p98 = scmp.eq.s32.totalorder %s14, 0
    %p99 = por %p97, %p98
    %p100 = scmp.ne.s32.totalorder %s86, %s87
    %p101 = scmp.eq.s32.totalorder %s15, 1
    %p102 = por %p100, %p101
    %p104 = scmp.ne.s32.totalorder %s87, %s103
    %p105 = scmp.eq.s32.totalorder %s15, 0
    %p106 = por %p104, %p105
    %s107 = ssub.s32 %s16, %s28
    %s108 = ssub.s32 %s17, %s24
    %s109 = sor.u32 %s107, %s108
    %p110 = scmp.eq.s32.totalorder %s109, 0
    %s112 = sadd.s32 %s111, 1
    %s113 = scalar_select %p110, %s111, %s112
    %p116 = pneg %p110
    %p117 = scmp.eq.s32.totalorder %s9, 1
    %p118 = por %p116, %p117
    %p119 = scmp.ne.s32.totalorder %s111, %s114
    %p120 = scmp.eq.s32.totalorder %s9, 0
    %p121 = por %p119, %p120
    %p122 = scmp.ne.s32.totalorder %s111, %s114
    %p123 = scmp.eq.s32.totalorder %s14, 1
    %p124 = por %p122, %p123
    %p125 = scmp.ne.s32.totalorder %s114, %s115
    %p126 = scmp.eq.s32.totalorder %s14, 0
    %p127 = por %p125, %p126
    %p128 = scmp.ne.s32.totalorder %s114, %s115
    %p129 = scmp.eq.s32.totalorder %s15, 1
    %p130 = por %p128, %p129
    %p132 = scmp.ne.s32.totalorder %s115, %s131
    %p133 = scmp.eq.s32.totalorder %s15, 0
    %p134 = por %p132, %p133
    %p135 = scmp.le.s32.totalorder 1, %s9
    %p136 = scmp.lt.s32.totalorder %s9, 3
    %p137 = pnand %p135, %p136
    %p138 = pneg %p137
    // Predicated region
    $region9: #{_lambda_.4} parent=5 // pred_check
      _
    $region10: #{_lambda_.4} parent=5 // pred_check_branch
      %140 = sbr.rel (%p137) target = $region12
    $region11: #{_lambda_.4} parent=5 // pred_region
      %s141 = ssub.s32 %s9, 1
      // Predicated region
      $region13: #{_lambda_.4} parent=11 // pred_check
        %p142 = pneg %p73
      $region14: #{_lambda_.4} parent=11 // pred_check_branch
        %144 = sbr.rel (%p142) target = $region16
      $region15: #{_lambda_.4} parent=11 // pred_region
        %p145 = scmp.lt.s32.totalorder %s19, 0
        %s146 = scalar_select %p145, %s19, 0
        %s147 = smul.addr %s146, 4
        %s148 = scalar_lea.vmem %s1, %s147
      $region16: #{_lambda_.4} parent=11 // pred_fallthru
        _
      // Predicated region
      $region17: #{_lambda_.4} parent=11 // pred_check
        %p149 = pneg %p99
      $region18: #{_lambda_.4} parent=11 // pred_check_branch
        %151 = sbr.rel (%p149) target = $region20
      $region19: #{_lambda_.4} parent=11 // pred_region
        %p152 = scmp.lt.s32.totalorder %s19, 0
        %s153 = scalar_select %p152, %s19, 0
        %s154 = scalar_lea.vmem %s2, %s153
      $region20: #{_lambda_.4} parent=11 // pred_fallthru
        _
    $region12: #{_lambda_.4} parent=5 // pred_fallthru
      _
    %p155 = scmp.lt.s32.totalorder %s9, 2
    // Predicated region
    $region21: #{_lambda_.4} parent=5 // pred_check
      %p156 = pneg %p155
    $region22: #{_lambda_.4} parent=5 // pred_check_branch
      %158 = sbr.rel (%p156) target = $region24
    $region23: #{_lambda_.4} parent=5 // pred_region
      // Predicated region
      $region25: #{_lambda_.4} parent=23 // pred_check
        %p159 = pneg %p41
      $region26: #{_lambda_.4} parent=23 // pred_check_branch
        %161 = sbr.rel (%p159) target = $region28
      $region27: #{_lambda_.4} parent=23 // pred_region
        %s162 = smul.u32 32, %s16
        %p163 = scmp.lt.s32.totalorder %s162, 63
        %s164 = scalar_select %p163, %s162, 63
        %s165 = smul.addr %s164, 4
        %s166 = scalar_lea.vmem %s0, %s165
        %s167 = smul.u32 32, %s16
      $region28: #{_lambda_.4} parent=23 // pred_fallthru
        _
    $region24: #{_lambda_.4} parent=5 // pred_fallthru
      _
    %p168 = scmp.le.s32.totalorder 1, %s9
    %p169 = scmp.lt.s32.totalorder %s9, 3
    %p170 = pnand %p168, %p169
    %p171 = pneg %p170
    // Predicated region
    $region29: #{_lambda_.4} parent=5 // pred_check
      _
    $region30: #{_lambda_.4} parent=5 // pred_check_branch
      %173 = sbr.rel (%p170) target = $region32
    $region31: #{_lambda_.4} parent=5 // pred_region
      %s174 = ssub.s32 %s9, 1
      %s175 = smul.u32 32, %s18
      %p176 = scmp.lt.s32.totalorder %s175, 63
      %s177 = scalar_select %p176, %s175, 63
      %s178 = smul.addr %s177, 4
      %s179 = scalar_lea.vmem %s0, %s178
      %p180 = pneg %p47
      %p181 = pneg %p44
      %p182 = scmp.lt.s32.totalorder %s19, 0
      %s183 = scalar_select %p182, %s19, 0
      %s184 = smul.addr %s183, 4
      %s185 = scalar_lea.vmem %s1, %s184
      %p186 = pneg %p73
      %p187 = pneg %p70
      %p188 = scmp.lt.s32.totalorder %s19, 0
      %s189 = scalar_select %p188, %s19, 0
      %s190 = scalar_lea.vmem %s2, %s189
      %p191 = pneg %p99
      %p192 = pneg %p96
      %p193 = pneg %p127
      %p194 = pneg %p124
      %s195 = smul.u32 32, %s18
      %p196 = scmp.lt.s32.totalorder %s195, 63
      %s197 = scalar_select %p196, %s195, 63
      %p198 = scmp.lt.s32.totalorder %s19, 0
      %s199 = scalar_select %p198, %s19, 0
      %s200 = sadd.s32 %s199, %s197
      %s201 = smul.addr %s200, 4
      %s202 = scalar_lea.vmem %s3, %s201
      %s203 = smul.u32 32, %s18
      %p204 = scmp.lt.s32.totalorder %s203, 63
      %s205 = scalar_select %p204, %s203, 63
      %s206 = smul.addr %s205, 4
      %s207 = scalar_lea.vmem %s0, %s206
      %s208 = smul.u32 32, %s18
      %p209 = scmp.lt.s32.totalorder %s19, 0
      %s210 = scalar_select %p209, %s19, 0
      %s211 = smul.addr %s210, 4
      %s212 = scalar_lea.vmem %s1, %s211
      %p213 = scmp.lt.s32.totalorder %s19, 0
      %s214 = scalar_select %p213, %s19, 0
      %s215 = scalar_lea.vmem %s2, %s214
      %s216 = smul.u32 32, %s18
      %p217 = scmp.lt.s32.totalorder %s216, 63
      %s218 = scalar_select %p217, %s216, 63
      %p219 = scmp.lt.s32.totalorder %s19, 0
      %s220 = scalar_select %p219, %s19, 0
      %s221 = sadd.s32 %s220, %s218
      %s222 = smul.addr %s221, 4
      %s223 = scalar_lea.vmem %s3, %s222
      %s224 = smul.u32 32, %s18
      %v226 = vld [vmem:[%s207] sm:$0xf]
      %v227 = vld [vmem:[%s207 + $0x4] sm:$0xf]
      %v228 = vld [vmem:[%s207 + $0x8] sm:$0xf]
      %v229 = vld [vmem:[%s207 + $0xc] sm:$0xf]
      %v230 = vld [vmem:[%s207 + $0x10] sm:$0xf]
      %v231 = vld [vmem:[%s207 + $0x14] sm:$0xf]
      %v232 = vld [vmem:[%s207 + $0x18] sm:$0xf]
      %v233 = vld [vmem:[%s207 + $0x1c] sm:$0xf]
      %v234 = vld [vmem:[%s207 + $0x20] sm:$0xf]
      %v235 = vld [vmem:[%s207 + $0x24] sm:$0xf]
      %v236 = vld [vmem:[%s207 + $0x28] sm:$0xf]
      %v237 = vld [vmem:[%s207 + $0x2c] sm:$0xf]
      %v238 = vld [vmem:[%s207 + $0x30] sm:$0xf]
      %v239 = vld [vmem:[%s207 + $0x34] sm:$0xf]
      %v240 = vld [vmem:[%s207 + $0x38] sm:$0xf]
      %v241 = vld [vmem:[%s207 + $0x3c] sm:$0xf]
      %v242 = vld [vmem:[%s207 + $0x40] sm:$0xf]
      %v243 = vld [vmem:[%s207 + $0x44] sm:$0xf]
      %v244 = vld [vmem:[%s207 + $0x48] sm:$0xf]
      %v245 = vld [vmem:[%s207 + $0x4c] sm:$0xf]
      %v246 = vld [vmem:[%s207 + $0x50] sm:$0xf]
      %v247 = vld [vmem:[%s207 + $0x54] sm:$0xf]
      %v248 = vld [vmem:[%s207 + $0x58] sm:$0xf]
      %v249 = vld [vmem:[%s207 + $0x5c] sm:$0xf]
      %v250 = vld [vmem:[%s207 + $0x60] sm:$0xf]
      %v251 = vld [vmem:[%s207 + $0x64] sm:$0xf]
      %v252 = vld [vmem:[%s207 + $0x68] sm:$0xf]
      %v253 = vld [vmem:[%s207 + $0x6c] sm:$0xf]
      %v254 = vld [vmem:[%s207 + $0x70] sm:$0xf]
      %v255 = vld [vmem:[%s207 + $0x74] sm:$0xf]
      %v256 = vld [vmem:[%s207 + $0x78] sm:$0xf]
      %v257 = vld [vmem:[%s207 + $0x7c] sm:$0xf]
      %v258 = vld [vmem:[%s212] sm:$0xf]
      %v259 = vld [vmem:[%s212 + $0x4] sm:$0xf]
      %v260 = vld [vmem:[%s212 + $0x8] sm:$0xf]
      %v261 = vld [vmem:[%s212 + $0xc] sm:$0xf]
      %v262 = vld [vmem:[%s212 + $0x10] sm:$0xf]
      %v263 = vld [vmem:[%s212 + $0x14] sm:$0xf]
      %v264 = vld [vmem:[%s215] sm:$0x1]
      %v266 = vperm.slane %v264, 0
      %v300 = vunpack.c.l.b16 %v226
      %v301 = vunpack.c.l.b16 %v227
      %v302 = vunpack.c.l.b16 %v228
      %v303 = vunpack.c.l.b16 %v229
      %v304 = vunpack.c.l.b16 %v230
      %v305 = vunpack.c.l.b16 %v231
      %v306 = vunpack.c.l.b16 %v232
      %v307 = vunpack.c.l.b16 %v233
      %v308 = vunpack.c.l.b16 %v234
      %v309 = vunpack.c.l.b16 %v235
      %v310 = vunpack.c.l.b16 %v236
      %v311 = vunpack.c.l.b16 %v237
      %v312 = vunpack.c.l.b16 %v238
      %v313 = vunpack.c.l.b16 %v239
      %v314 = vunpack.c.l.b16 %v240
      %v315 = vunpack.c.l.b16 %v241
      %v316 = vunpack.c.l.b16 %v242
      %v317 = vunpack.c.l.b16 %v243
      %v318 = vunpack.c.l.b16 %v244
      %v319 = vunpack.c.l.b16 %v245
      %v320 = vunpack.c.l.b16 %v246
      %v321 = vunpack.c.l.b16 %v247
      %v322 = vunpack.c.l.b16 %v248
      %v323 = vunpack.c.l.b16 %v249
      %v324 = vunpack.c.l.b16 %v250
      %v325 = vunpack.c.l.b16 %v251
      %v326 = vunpack.c.l.b16 %v252
      %v327 = vunpack.c.l.b16 %v253
      %v328 = vunpack.c.l.b16 %v254
      %v329 = vunpack.c.l.b16 %v255
      %v330 = vunpack.c.l.b16 %v256
      %v331 = vunpack.c.l.b16 %v257
      %v332 = vpack.c.b16 %v301, %v300
      %v333 = vpack.c.b16 %v303, %v302
      %v334 = vpack.c.b16 %v305, %v304
      %v335 = vpack.c.b16 %v307, %v306
      %v336 = vpack.c.b16 %v309, %v308
      %v337 = vpack.c.b16 %v311, %v310
      %v338 = vpack.c.b16 %v313, %v312
      %v339 = vpack.c.b16 %v315, %v314
      %v340 = vpack.c.b16 %v317, %v316
      %v341 = vpack.c.b16 %v319, %v318
      %v342 = vpack.c.b16 %v321, %v320
      %v343 = vpack.c.b16 %v323, %v322
      %v344 = vpack.c.b16 %v325, %v324
      %v345 = vpack.c.b16 %v327, %v326
      %v346 = vpack.c.b16 %v329, %v328
      %v347 = vpack.c.b16 %v331, %v330
      %v354 = vunpack.c.l.b16 %v258
      %v355 = vunpack.c.l.b16 %v259
      %v356 = vunpack.c.l.b16 %v260
      %v357 = vunpack.c.l.b16 %v261
      %v358 = vunpack.c.l.b16 %v262
      %v359 = vunpack.c.l.b16 %v263
      %v360 = vpack.c.b16 %v355, %v354
      %v361 = vpack.c.b16 %v357, %v356
      %v362 = vpack.c.b16 %v359, %v358
      %vm366 = vcmask 392192
      %v368 = vsel %vm366, %v332, 0
      %v371 = vsel %vm366, %v333, 0
      %v374 = vsel %vm366, %v334, 0
      %v377 = vsel %vm366, %v335, 0
      %v380 = vsel %vm366, %v336, 0
      %v383 = vsel %vm366, %v337, 0
      %v386 = vsel %vm366, %v338, 0
      %v389 = vsel %vm366, %v339, 0
      %v392 = vsel %vm366, %v340, 0
      %v395 = vsel %vm366, %v341, 0
      %v398 = vsel %vm366, %v342, 0
      %v401 = vsel %vm366, %v343, 0
      %v404 = vsel %vm366, %v344, 0
      %v407 = vsel %vm366, %v345, 0
      %v410 = vsel %vm366, %v346, 0
      %v413 = vsel %vm366, %v347, 0
      %415 = vmatpush.bf16.msra.mxu0 0
      %416 = vmatpush.bf16.msra.mxu0 0
      %417 = vmatpush.bf16.msra.mxu0 0
      %418 = vmatpush.bf16.msra.mxu0 0
      %419 = vmatpush.bf16.msra.mxu0 0
      %420 = vmatpush.bf16.msra.mxu0 %v362
      %421 = vmatpush.bf16.msra.mxu0 %v361
      %422 = vmatpush.bf16.msra.mxu0 %v360
      %423 = vmatmul.bf16.gmra.mxu0 %v368
      %v424 = vpop.f32.mrf.mxu0
      %v425 = vadd.f32 %v266, %v424
      %v426 = vpop.f32.mrf.mxu0
      %v427 = vadd.f32 %v266, %v426
      %428 = vmatmul.bf16.gmra.mxu0 %v371
      %v429 = vpop.f32.mrf.mxu0
      %v430 = vadd.f32 %v266, %v429
      %v431 = vpop.f32.mrf.mxu0
      %v432 = vadd.f32 %v266, %v431
      %433 = vmatmul.bf16.gmra.mxu0 %v374
      %v434 = vpop.f32.mrf.mxu0
      %v435 = vadd.f32 %v266, %v434
      %v436 = vpop.f32.mrf.mxu0
      %v437 = vadd.f32 %v266, %v436
      %438 = vmatmul.bf16.gmra.mxu0 %v377
      %v439 = vpop.f32.mrf.mxu0
      %v440 = vadd.f32 %v266, %v439
      %v441 = vpop.f32.mrf.mxu0
      %v442 = vadd.f32 %v266, %v441
      %443 = vmatmul.bf16.gmra.mxu0 %v380
      %v444 = vpop.f32.mrf.mxu0
      %v445 = vadd.f32 %v266, %v444
      %v446 = vpop.f32.mrf.mxu0
      %v447 = vadd.f32 %v266, %v446
      %448 = vmatmul.bf16.gmra.mxu0 %v383
      %v449 = vpop.f32.mrf.mxu0
      %v450 = vadd.f32 %v266, %v449
      %v451 = vpop.f32.mrf.mxu0
      %v452 = vadd.f32 %v266, %v451
      %453 = vmatmul.bf16.gmra.mxu0 %v386
      %v454 = vpop.f32.mrf.mxu0
      %v455 = vadd.f32 %v266, %v454
      %v456 = vpop.f32.mrf.mxu0
      %v457 = vadd.f32 %v266, %v456
      %458 = vmatmul.bf16.gmra.mxu0 %v389
      %v459 = vpop.f32.mrf.mxu0
      %v460 = vadd.f32 %v266, %v459
      %v461 = vpop.f32.mrf.mxu0
      %v462 = vadd.f32 %v266, %v461
      %463 = vmatmul.bf16.gmra.mxu0 %v392
      %v464 = vpop.f32.mrf.mxu0
      %v465 = vadd.f32 %v266, %v464
      %v466 = vpop.f32.mrf.mxu0
      %v467 = vadd.f32 %v266, %v466
      %468 = vmatmul.bf16.gmra.mxu0 %v395
      %v469 = vpop.f32.mrf.mxu0
      %v470 = vadd.f32 %v266, %v469
      %v471 = vpop.f32.mrf.mxu0
      %v472 = vadd.f32 %v266, %v471
      %473 = vmatmul.bf16.gmra.mxu0 %v398
      %v474 = vpop.f32.mrf.mxu0
      %v475 = vadd.f32 %v266, %v474
      %v476 = vpop.f32.mrf.mxu0
      %v477 = vadd.f32 %v266, %v476
      %478 = vmatmul.bf16.gmra.mxu0 %v401
      %v479 = vpop.f32.mrf.mxu0
      %v480 = vadd.f32 %v266, %v479
      %v481 = vpop.f32.mrf.mxu0
      %v482 = vadd.f32 %v266, %v481
      %483 = vmatmul.bf16.gmra.mxu0 %v404
      %v484 = vpop.f32.mrf.mxu0
      %v485 = vadd.f32 %v266, %v484
      %v486 = vpop.f32.mrf.mxu0
      %v487 = vadd.f32 %v266, %v486
      %488 = vmatmul.bf16.gmra.mxu0 %v407
      %v489 = vpop.f32.mrf.mxu0
      %v490 = vadd.f32 %v266, %v489
      %v491 = vpop.f32.mrf.mxu0
      %v492 = vadd.f32 %v266, %v491
      %493 = vmatmul.bf16.gmra.mxu0 %v410
      %v494 = vpop.f32.mrf.mxu0
      %v495 = vadd.f32 %v266, %v494
      %v496 = vpop.f32.mrf.mxu0
      %v497 = vadd.f32 %v266, %v496
      %498 = vmatmul.bf16.gmra.mxu0 %v413
      %v499 = vpop.f32.mrf.mxu0
      %v500 = vadd.f32 %v266, %v499
      %v501 = vpop.f32.mrf.mxu0
      %v502 = vadd.f32 %v266, %v501
      %503 = vdwg.mxu0
      %v504 = vpack.c.bf16 %v425, %v425
      %v505 = vpack.c.bf16 %v427, %v427
      %v506 = vpack.c.bf16 %v430, %v430
      %v507 = vpack.c.bf16 %v432, %v432
      %v508 = vpack.c.bf16 %v435, %v435
      %v509 = vpack.c.bf16 %v437, %v437
      %v510 = vpack.c.bf16 %v440, %v440
      %v511 = vpack.c.bf16 %v442, %v442
      %v512 = vpack.c.bf16 %v445, %v445
      %v513 = vpack.c.bf16 %v447, %v447
      %v514 = vpack.c.bf16 %v450, %v450
      %v515 = vpack.c.bf16 %v452, %v452
      %v516 = vpack.c.bf16 %v455, %v455
      %v517 = vpack.c.bf16 %v457, %v457
      %v518 = vpack.c.bf16 %v460, %v460
      %v519 = vpack.c.bf16 %v462, %v462
      %v520 = vpack.c.bf16 %v465, %v465
      %v521 = vpack.c.bf16 %v467, %v467
      %v522 = vpack.c.bf16 %v470, %v470
      %v523 = vpack.c.bf16 %v472, %v472
      %v524 = vpack.c.bf16 %v475, %v475
      %v525 = vpack.c.bf16 %v477, %v477
      %v526 = vpack.c.bf16 %v480, %v480
      %v527 = vpack.c.bf16 %v482, %v482
      %v528 = vpack.c.bf16 %v485, %v485
      %v529 = vpack.c.bf16 %v487, %v487
      %v530 = vpack.c.bf16 %v490, %v490
      %v531 = vpack.c.bf16 %v492, %v492
      %v532 = vpack.c.bf16 %v495, %v495
      %v533 = vpack.c.bf16 %v497, %v497
      %v534 = vpack.c.bf16 %v500, %v500
      %v535 = vpack.c.bf16 %v502, %v502
      %536 = vst [vmem:[%s223] sm:$0xf] %v504
      %537 = vst [vmem:[%s223 + $0x4] sm:$0xf] %v505
      %538 = vst [vmem:[%s223 + $0x8] sm:$0xf] %v506
      %539 = vst [vmem:[%s223 + $0xc] sm:$0xf] %v507
      %540 = vst [vmem:[%s223 + $0x10] sm:$0xf] %v508
      %541 = vst [vmem:[%s223 + $0x14] sm:$0xf] %v509
      %542 = vst [vmem:[%s223 + $0x18] sm:$0xf] %v510
      %543 = vst [vmem:[%s223 + $0x1c] sm:$0xf] %v511
      %544 = vst [vmem:[%s223 + $0x20] sm:$0xf] %v512
      %545 = vst [vmem:[%s223 + $0x24] sm:$0xf] %v513
      %546 = vst [vmem:[%s223 + $0x28] sm:$0xf] %v514
      %547 = vst [vmem:[%s223 + $0x2c] sm:$0xf] %v515
      %548 = vst [vmem:[%s223 + $0x30] sm:$0xf] %v516
      %549 = vst [vmem:[%s223 + $0x34] sm:$0xf] %v517
      %550 = vst [vmem:[%s223 + $0x38] sm:$0xf] %v518
      %551 = vst [vmem:[%s223 + $0x3c] sm:$0xf] %v519
      %552 = vst [vmem:[%s223 + $0x40] sm:$0xf] %v520
      %553 = vst [vmem:[%s223 + $0x44] sm:$0xf] %v521
      %554 = vst [vmem:[%s223 + $0x48] sm:$0xf] %v522
      %555 = vst [vmem:[%s223 + $0x4c] sm:$0xf] %v523
      %556 = vst [vmem:[%s223 + $0x50] sm:$0xf] %v524
      %557 = vst [vmem:[%s223 + $0x54] sm:$0xf] %v525
      %558 = vst [vmem:[%s223 + $0x58] sm:$0xf] %v526
      %559 = vst [vmem:[%s223 + $0x5c] sm:$0xf] %v527
      %560 = vst [vmem:[%s223 + $0x60] sm:$0xf] %v528
      %561 = vst [vmem:[%s223 + $0x64] sm:$0xf] %v529
      %562 = vst [vmem:[%s223 + $0x68] sm:$0xf] %v530
      %563 = vst [vmem:[%s223 + $0x6c] sm:$0xf] %v531
      %564 = vst [vmem:[%s223 + $0x70] sm:$0xf] %v532
      %565 = vst [vmem:[%s223 + $0x74] sm:$0xf] %v533
      %566 = vst [vmem:[%s223 + $0x78] sm:$0xf] %v534
      %567 = vst [vmem:[%s223 + $0x7c] sm:$0xf] %v535
      %s568 = smul.u32 32, %s18
      %p569 = scmp.lt.s32.totalorder %s568, 63
      %s570 = scalar_select %p569, %s568, 63
      %p571 = scmp.lt.s32.totalorder %s19, 0
      %s572 = scalar_select %p571, %s19, 0
      %s573 = sadd.s32 %s572, %s570
      %s574 = smul.addr %s573, 4
      %s575 = scalar_lea.vmem %s3, %s574
      // Predicated region
      $region33: #{_lambda_.4} parent=31 // pred_check
        %p576 = pneg %p124
      $region34: #{_lambda_.4} parent=31 // pred_check_branch
        %578 = sbr.rel (%p576) target = $region36
      $region35: #{_lambda_.4} parent=31 // pred_region
        %s579 = smul.u32 32, %s18
      $region36: #{_lambda_.4} parent=31 // pred_fallthru
        _
    $region32: #{_lambda_.4} parent=5 // pred_fallthru
      _
    %p580 = scmp.le.s32.totalorder 2, %s9
    // Predicated region
    $region37: #{_lambda_.4} parent=5 // pred_check
      %p581 = pneg %p580
    $region38: #{_lambda_.4} parent=5 // pred_check_branch
      %583 = sbr.rel (%p581) target = $region40
    $region39: #{_lambda_.4} parent=5 // pred_region
      %s584 = ssub.s32 %s9, 2
      // Predicated region
      $region41: #{_lambda_.4} parent=39 // pred_check
        %p585 = pneg %p130
      $region42: #{_lambda_.4} parent=39 // pred_check_branch
        %587 = sbr.rel (%p585) target = $region44
      $region43: #{_lambda_.4} parent=39 // pred_region
        %s588 = smul.u32 32, %s20
        %p589 = scmp.lt.s32.totalorder %s588, 63
        %s590 = scalar_select %p589, %s588, 63
        %p591 = scmp.lt.s32.totalorder %s21, 0
        %s592 = scalar_select %p591, %s21, 0
        %s593 = sadd.s32 %s592, %s590
        %s594 = smul.addr %s593, 4
        %s595 = scalar_lea.vmem %s3, %s594
      $region44: #{_lambda_.4} parent=39 // pred_fallthru
        _
    $region40: #{_lambda_.4} parent=5 // pred_fallthru
      _
  $region6: #{_lambda_.4} parent=0 // loop_footer
    %s13 = sadd.s32 1, %s9
  $region7: #{_lambda_.4} parent=0 // loop_footer_branch
    %8 = sbr.rel target = $region3
  $region8: #{_lambda_.4} parent=0 // loop_exit
    _

// kernel: _lambda_.5
$region0: #{_lambda_.5}
  #allocation0 [shape = 'u32[]', space=smem, size = 0x4, offset = 0x4, fixed_abs, tag = 'smem constant byte address 0x4 - core index']
  #allocation1 [shape = 'u32[72,128]{1,0:T(1,128)}', space=vmem, size = 0x9000, scoped, tag = 'internal scratch']
  %s0 = inlined_call_operand.vmem [shape: bf16[128,128], index: 0, kind: input, shape index: {}]
  %s1 = inlined_call_operand.vmem [shape: bf16[128,128], index: 1, kind: input, shape index: {}]
  %s2 = inlined_call_operand.vmem [shape: f32[1,128], index: 2, kind: input, shape index: {}]
  %s3 = inlined_call_operand.vmem [shape: bf16[128,128], index: 3, kind: output, shape index: {}]
  %s4 = sld [smem:[#allocation0]]
  $region45: #{_lambda_.5} parent=0
    _
  %s6 = ssub.s32 1, %s4
  %s7 = scalar_select 0, %s6, %s4
  loop: start=0, step=1, limit=4
  $region2: #{_lambda_.5} parent=0 // loop_pre_header
    _
  $region3: #{_lambda_.5} parent=0 // loop_header
    %s9 = sphi 0, %s13
    %p10 = scmp.ge.s32.totalorder %s9, 4
    %s16 = sphi 0, %s28
    %s17 = sphi 0, %s24
    %s18 = sphi 0, %s16
    %s19 = sphi 0, %s17
    %s20 = sphi 0, %s18
    %s21 = sphi 0, %s19
    %s31 = sphi 0, %s33
    %s34 = sphi 0, %s31
    %s35 = sphi 0, %s34
    %s51 = sphi 0, %s35
    %s57 = sphi 0, %s59
    %s60 = sphi 0, %s57
    %s61 = sphi 0, %s60
    %s77 = sphi 0, %s61
    %s83 = sphi 0, %s85
    %s86 = sphi 0, %s83
    %s87 = sphi 0, %s86
    %s103 = sphi 0, %s87
    %s111 = sphi 0, %s113
    %s114 = sphi 0, %s111
    %s115 = sphi 0, %s114
    %s131 = sphi 0, %s115
  $region4: #{_lambda_.5} parent=0 // loop_header_branch
    %12 = sbr.rel (%p10) target = $region8
  $region5: #{_lambda_.5} parent=0 // loop_body
    %s14 = ssub.s32 %s9, 1
    %s15 = ssub.s32 %s9, 2
    %s22 = sadd.s32 1, %s17
    %p23 = scmp.ge.s32.totalorder %s22, 1
    %s24 = scalar_select %p23, 0, %s22
    %s25 = sadd.s32 1, %s16
    %s26 = scalar_select %p23, %s25, %s16
    %p27 = scmp.ge.s32.totalorder %s26, 2
    %s28 = scalar_select %p27, 0, %s26
    %s29 = ssub.s32 %s16, %s28
    %p30 = scmp.eq.s32.totalorder %s29, 0
    %s32 = sadd.s32 %s31, 1
    %s33 = scalar_select %p30, %s31, %s32
    %p36 = pneg %p30
    %p37 = scmp.eq.s32.totalorder %s9, 1
    %p38 = por %p36, %p37
    %p39 = scmp.ne.s32.totalorder %s31, %s34
    %p40 = scmp.eq.s32.totalorder %s9, 0
    %p41 = por %p39, %p40
    %p42 = scmp.ne.s32.totalorder %s31, %s34
    %p43 = scmp.eq.s32.totalorder %s14, 1
    %p44 = por %p42, %p43
    %p45 = scmp.ne.s32.totalorder %s34, %s35
    %p46 = scmp.eq.s32.totalorder %s14, 0
    %p47 = por %p45, %p46
    %p48 = scmp.ne.s32.totalorder %s34, %s35
    %p49 = scmp.eq.s32.totalorder %s15, 1
    %p50 = por %p48, %p49
    %p52 = scmp.ne.s32.totalorder %s35, %s51
    %p53 = scmp.eq.s32.totalorder %s15, 0
    %p54 = por %p52, %p53
    %s55 = ssub.s32 %s17, %s24
    %p56 = scmp.eq.s32.totalorder %s55, 0
    %s58 = sadd.s32 %s57, 1
    %s59 = scalar_select %p56, %s57, %s58
    %p62 = pneg %p56
    %p63 = scmp.eq.s32.totalorder %s9, 1
    %p64 = por %p62, %p63
    %p65 = scmp.ne.s32.totalorder %s57, %s60
    %p66 = scmp.eq.s32.totalorder %s9, 0
    %p67 = por %p65, %p66
    %p68 = scmp.ne.s32.totalorder %s57, %s60
    %p69 = scmp.eq.s32.totalorder %s14, 1
    %p70 = por %p68, %p69
    %p71 = scmp.ne.s32.totalorder %s60, %s61
    %p72 = scmp.eq.s32.totalorder %s14, 0
    %p73 = por %p71, %p72
    %p74 = scmp.ne.s32.totalorder %s60, %s61
    %p75 = scmp.eq.s32.totalorder %s15, 1
    %p76 = por %p74, %p75
    %p78 = scmp.ne.s32.totalorder %s61, %s77
    %p79 = scmp.eq.s32.totalorder %s15, 0
    %p80 = por %p78, %p79
    %s81 = ssub.s32 %s17, %s24
    %p82 = scmp.eq.s32.totalorder %s81, 0
    %s84 = sadd.s32 %s83, 1
    %s85 = scalar_select %p82, %s83, %s84
    %p88 = pneg %p82
    %p89 = scmp.eq.s32.totalorder %s9, 1
    %p90 = por %p88, %p89
    %p91 = scmp.ne.s32.totalorder %s83, %s86
    %p92 = scmp.eq.s32.totalorder %s9, 0
    %p93 = por %p91, %p92
    %p94 = scmp.ne.s32.totalorder %s83, %s86
    %p95 = scmp.eq.s32.totalorder %s14, 1
    %p96 = por %p94, %p95
    %p97 = scmp.ne.s32.totalorder %s86, %s87
    %p98 = scmp.eq.s32.totalorder %s14, 0
    %p99 = por %p97, %p98
    %p100 = scmp.ne.s32.totalorder %s86, %s87
    %p101 = scmp.eq.s32.totalorder %s15, 1
    %p102 = por %p100, %p101
    %p104 = scmp.ne.s32.totalorder %s87, %s103
    %p105 = scmp.eq.s32.totalorder %s15, 0
    %p106 = por %p104, %p105
    %s107 = ssub.s32 %s16, %s28
    %s108 = ssub.s32 %s17, %s24
    %s109 = sor.u32 %s107, %s108
    %p110 = scmp.eq.s32.totalorder %s109, 0
    %s112 = sadd.s32 %s111, 1
    %s113 = scalar_select %p110, %s111, %s112
    %p116 = pneg %p110
    %p117 = scmp.eq.s32.totalorder %s9, 1
    %p118 = por %p116, %p117
    %p119 = scmp.ne.s32.totalorder %s111, %s114
    %p120 = scmp.eq.s32.totalorder %s9, 0
    %p121 = por %p119, %p120
    %p122 = scmp.ne.s32.totalorder %s111, %s114
    %p123 = scmp.eq.s32.totalorder %s14, 1
    %p124 = por %p122, %p123
    %p125 = scmp.ne.s32.totalorder %s114, %s115
    %p126 = scmp.eq.s32.totalorder %s14, 0
    %p127 = por %p125, %p126
    %p128 = scmp.ne.s32.totalorder %s114, %s115
    %p129 = scmp.eq.s32.totalorder %s15, 1
    %p130 = por %p128, %p129
    %p132 = scmp.ne.s32.totalorder %s115, %s131
    %p133 = scmp.eq.s32.totalorder %s15, 0
    %p134 = por %p132, %p133
    %p135 = scmp.le.s32.totalorder 1, %s9
    %p136 = scmp.lt.s32.totalorder %s9, 3
    %p137 = pnand %p135, %p136
    %p138 = pneg %p137
    // Predicated region
    $region9: #{_lambda_.5} parent=5 // pred_check
      _
    $region10: #{_lambda_.5} parent=5 // pred_check_branch
      %140 = sbr.rel (%p137) target = $region12
    $region11: #{_lambda_.5} parent=5 // pred_region
      %s141 = ssub.s32 %s9, 1
      // Predicated region
      $region13: #{_lambda_.5} parent=11 // pred_check
        %p142 = pneg %p73
      $region14: #{_lambda_.5} parent=11 // pred_check_branch
        %144 = sbr.rel (%p142) target = $region16
      $region15: #{_lambda_.5} parent=11 // pred_region
        %p145 = scmp.lt.s32.totalorder %s19, 0
        %s146 = scalar_select %p145, %s19, 0
        %s147 = smul.addr %s146, 4
        %s148 = scalar_lea.vmem %s1, %s147
      $region16: #{_lambda_.5} parent=11 // pred_fallthru
        _
      // Predicated region
      $region17: #{_lambda_.5} parent=11 // pred_check
        %p149 = pneg %p99
      $region18: #{_lambda_.5} parent=11 // pred_check_branch
        %151 = sbr.rel (%p149) target = $region20
      $region19: #{_lambda_.5} parent=11 // pred_region
        %p152 = scmp.lt.s32.totalorder %s19, 0
        %s153 = scalar_select %p152, %s19, 0
        %s154 = scalar_lea.vmem %s2, %s153
      $region20: #{_lambda_.5} parent=11 // pred_fallthru
        _
    $region12: #{_lambda_.5} parent=5 // pred_fallthru
      _
    %p155 = scmp.lt.s32.totalorder %s9, 2
    // Predicated region
    $region21: #{_lambda_.5} parent=5 // pred_check
      %p156 = pneg %p155
    $region22: #{_lambda_.5} parent=5 // pred_check_branch
      %158 = sbr.rel (%p156) target = $region24
    $region23: #{_lambda_.5} parent=5 // pred_region
      // Predicated region
      $region25: #{_lambda_.5} parent=23 // pred_check
        %p159 = pneg %p41
      $region26: #{_lambda_.5} parent=23 // pred_check_branch
        %161 = sbr.rel (%p159) target = $region28
      $region27: #{_lambda_.5} parent=23 // pred_region
        %s162 = smul.u32 8, %s16
        %p163 = scmp.lt.s32.totalorder %s162, 15
        %s164 = scalar_select %p163, %s162, 15
        %s165 = smul.addr %s164, 4
        %s166 = scalar_lea.vmem %s0, %s165
        %s167 = smul.u32 8, %s16
      $region28: #{_lambda_.5} parent=23 // pred_fallthru
        _
    $region24: #{_lambda_.5} parent=5 // pred_fallthru
      _
    %p168 = scmp.le.s32.totalorder 1, %s9
    %p169 = scmp.lt.s32.totalorder %s9, 3
    %p170 = pnand %p168, %p169
    %p171 = pneg %p170
    // Predicated region
    $region29: #{_lambda_.5} parent=5 // pred_check
      _
    $region30: #{_lambda_.5} parent=5 // pred_check_branch
      %173 = sbr.rel (%p170) target = $region32
    $region31: #{_lambda_.5} parent=5 // pred_region
      %s174 = ssub.s32 %s9, 1
      %s175 = smul.u32 8, %s18
      %p176 = scmp.lt.s32.totalorder %s175, 15
      %s177 = scalar_select %p176, %s175, 15
      %s178 = smul.addr %s177, 4
      %s179 = scalar_lea.vmem %s0, %s178
      %p180 = pneg %p47
      %p181 = pneg %p44
      %p182 = scmp.lt.s32.totalorder %s19, 0
      %s183 = scalar_select %p182, %s19, 0
      %s184 = smul.addr %s183, 4
      %s185 = scalar_lea.vmem %s1, %s184
      %p186 = pneg %p73
      %p187 = pneg %p70
      %p188 = scmp.lt.s32.totalorder %s19, 0
      %s189 = scalar_select %p188, %s19, 0
      %s190 = scalar_lea.vmem %s2, %s189
      %p191 = pneg %p99
      %p192 = pneg %p96
      %p193 = pneg %p127
      %p194 = pneg %p124
      %s195 = smul.u32 8, %s18
      %p196 = scmp.lt.s32.totalorder %s195, 15
      %s197 = scalar_select %p196, %s195, 15
      %p198 = scmp.lt.s32.totalorder %s19, 0
      %s199 = scalar_select %p198, %s19, 0
      %s200 = sadd.s32 %s199, %s197
      %s201 = smul.addr %s200, 4
      %s202 = scalar_lea.vmem %s3, %s201
      %s203 = smul.u32 8, %s18
      %p204 = scmp.lt.s32.totalorder %s203, 15
      %s205 = scalar_select %p204, %s203, 15
      %s206 = smul.addr %s205, 4
      %s207 = scalar_lea.vmem %s0, %s206
      %s208 = smul.u32 8, %s18
      %p209 = scmp.lt.s32.totalorder %s19, 0
      %s210 = scalar_select %p209, %s19, 0
      %s211 = smul.addr %s210, 4
      %s212 = scalar_lea.vmem %s1, %s211
      %p213 = scmp.lt.s32.totalorder %s19, 0
      %s214 = scalar_select %p213, %s19, 0
      %s215 = scalar_lea.vmem %s2, %s214
      %s216 = smul.u32 8, %s18
      %p217 = scmp.lt.s32.totalorder %s216, 15
      %s218 = scalar_select %p217, %s216, 15
      %p219 = scmp.lt.s32.totalorder %s19, 0
      %s220 = scalar_select %p219, %s19, 0
      %s221 = sadd.s32 %s220, %s218
      %s222 = smul.addr %s221, 4
      %s223 = scalar_lea.vmem %s3, %s222
      %s224 = smul.u32 8, %s18
      %v225 = vld [vmem:[%s207] sm:$0xf]
      %v226 = vld [vmem:[%s207 + $0x4] sm:$0xf]
      %v227 = vld [vmem:[%s207 + $0x8] sm:$0xf]
      %v228 = vld [vmem:[%s207 + $0xc] sm:$0xf]
      %v229 = vld [vmem:[%s207 + $0x10] sm:$0xf]
      %v230 = vld [vmem:[%s207 + $0x14] sm:$0xf]
      %v231 = vld [vmem:[%s207 + $0x18] sm:$0xf]
      %v232 = vld [vmem:[%s207 + $0x1c] sm:$0xf]
      %v233 = vld [vmem:[%s212] sm:$0xf]
      %v234 = vld [vmem:[%s212 + $0x4] sm:$0xf]
      %v235 = vld [vmem:[%s212 + $0x8] sm:$0xf]
      %v236 = vld [vmem:[%s212 + $0xc] sm:$0xf]
      %v237 = vld [vmem:[%s212 + $0x10] sm:$0xf]
      %v238 = vld [vmem:[%s212 + $0x14] sm:$0xf]
      %v239 = vld [vmem:[%s212 + $0x18] sm:$0xf]
      %v240 = vld [vmem:[%s212 + $0x1c] sm:$0xf]
      %v241 = vld [vmem:[%s212 + $0x20] sm:$0xf]
      %v242 = vld [vmem:[%s212 + $0x24] sm:$0xf]
      %v243 = vld [vmem:[%s212 + $0x28] sm:$0xf]
      %v244 = vld [vmem:[%s212 + $0x2c] sm:$0xf]
      %v245 = vld [vmem:[%s212 + $0x30] sm:$0xf]
      %v246 = vld [vmem:[%s212 + $0x34] sm:$0xf]
      %v247 = vld [vmem:[%s212 + $0x38] sm:$0xf]
      %v248 = vld [vmem:[%s212 + $0x3c] sm:$0xf]
      %v249 = vld [vmem:[%s215] sm:$0x1]
      %v251 = vperm.slane %v249, 0
      %v261 = vunpack.c.l.b16 %v225
      %v262 = vunpack.c.l.b16 %v226
      %v263 = vunpack.c.l.b16 %v227
      %v264 = vunpack.c.l.b16 %v228
      %v265 = vunpack.c.l.b16 %v229
      %v266 = vunpack.c.l.b16 %v230
      %v267 = vunpack.c.l.b16 %v231
      %v268 = vunpack.c.l.b16 %v232
      %v269 = vpack.c.b16 %v262, %v261
      %v270 = vpack.c.b16 %v264, %v263
      %v271 = vpack.c.b16 %v266, %v265
      %v272 = vpack.c.b16 %v268, %v267
      %v293 = vunpack.c.l.b16 %v233
      %v294 = vunpack.c.l.b16 %v234
      %v295 = vunpack.c.l.b16 %v235
      %v296 = vunpack.c.l.b16 %v236
      %v297 = vunpack.c.l.b16 %v237
      %v298 = vunpack.c.l.b16 %v238
      %v299 = vunpack.c.l.b16 %v239
      %v300 = vunpack.c.l.b16 %v240
      %v301 = vunpack.c.l.b16 %v241
      %v302 = vunpack.c.l.b16 %v242
      %v303 = vunpack.c.l.b16 %v243
      %v304 = vunpack.c.l.b16 %v244
      %v305 = vunpack.c.l.b16 %v245
      %v306 = vunpack.c.l.b16 %v246
      %v307 = vunpack.c.l.b16 %v247
      %v308 = vunpack.c.l.b16 %v248
      %v309 = vpack.c.b16 %v294, %v293
      %v310 = vpack.c.b16 %v296, %v295
      %v311 = vpack.c.b16 %v298, %v297
      %v312 = vpack.c.b16 %v300, %v299
      %v313 = vpack.c.b16 %v302, %v301
      %v314 = vpack.c.b16 %v304, %v303
      %v315 = vpack.c.b16 %v306, %v305
      %v316 = vpack.c.b16 %v308, %v307
      %325 = vmatpush.bf16.msra.mxu0 %v316
      %326 = vmatpush.bf16.msra.mxu0 %v315
      %327 = vmatpush.bf16.msra.mxu0 %v314
      %328 = vmatpush.bf16.msra.mxu0 %v313
      %329 = vmatpush.bf16.msra.mxu0 %v312
      %330 = vmatpush.bf16.msra.mxu0 %v311
      %331 = vmatpush.bf16.msra.mxu0 %v310
      %332 = vmatpush.bf16.msra.mxu0 %v309
      %333 = vmatmul.bf16.gmra.mxu0 %v269
      %v334 = vpop.f32.mrf.mxu0
      %v335 = vadd.f32 %v251, %v334
      %v336 = vpop.f32.mrf.mxu0
      %v337 = vadd.f32 %v251, %v336
      %338 = vmatmul.bf16.gmra.mxu0 %v270
      %v339 = vpop.f32.mrf.mxu0
      %v340 = vadd.f32 %v251, %v339
      %v341 = vpop.f32.mrf.mxu0
      %v342 = vadd.f32 %v251, %v341
      %343 = vmatmul.bf16.gmra.mxu0 %v271
      %v344 = vpop.f32.mrf.mxu0
      %v345 = vadd.f32 %v251, %v344
      %v346 = vpop.f32.mrf.mxu0
      %v347 = vadd.f32 %v251, %v346
      %348 = vmatmul.bf16.gmra.mxu0 %v272
      %v349 = vpop.f32.mrf.mxu0
      %v350 = vadd.f32 %v251, %v349
      %v351 = vpop.f32.mrf.mxu0
      %v352 = vadd.f32 %v251, %v351
      %353 = vdwg.mxu0
      %v354 = vpack.c.bf16 %v335, %v335
      %v355 = vpack.c.bf16 %v337, %v337
      %v356 = vpack.c.bf16 %v340, %v340
      %v357 = vpack.c.bf16 %v342, %v342
      %v358 = vpack.c.bf16 %v345, %v345
      %v359 = vpack.c.bf16 %v347, %v347
      %v360 = vpack.c.bf16 %v350, %v350
      %v361 = vpack.c.bf16 %v352, %v352
      %362 = vst [vmem:[%s223] sm:$0xf] %v354
      %363 = vst [vmem:[%s223 + $0x4] sm:$0xf] %v355
      %364 = vst [vmem:[%s223 + $0x8] sm:$0xf] %v356
      %365 = vst [vmem:[%s223 + $0xc] sm:$0xf] %v357
      %366 = vst [vmem:[%s223 + $0x10] sm:$0xf] %v358
      %367 = vst [vmem:[%s223 + $0x14] sm:$0xf] %v359
      %368 = vst [vmem:[%s223 + $0x18] sm:$0xf] %v360
      %369 = vst [vmem:[%s223 + $0x1c] sm:$0xf] %v361
      %s370 = smul.u32 8, %s18
      %p371 = scmp.lt.s32.totalorder %s370, 15
      %s372 = scalar_select %p371, %s370, 15
      %p373 = scmp.lt.s32.totalorder %s19, 0
      %s374 = scalar_select %p373, %s19, 0
      %s375 = sadd.s32 %s374, %s372
      %s376 = smul.addr %s375, 4
      %s377 = scalar_lea.vmem %s3, %s376
      // Predicated region
      $region33: #{_lambda_.5} parent=31 // pred_check
        %p378 = pneg %p124
      $region34: #{_lambda_.5} parent=31 // pred_check_branch
        %380 = sbr.rel (%p378) target = $region36
      $region35: #{_lambda_.5} parent=31 // pred_region
        %s381 = smul.u32 8, %s18
      $region36: #{_lambda_.5} parent=31 // pred_fallthru
        _
    $region32: #{_lambda_.5} parent=5 // pred_fallthru
      _
    %p382 = scmp.le.s32.totalorder 2, %s9
    // Predicated region
    $region37: #{_lambda_.5} parent=5 // pred_check
      %p383 = pneg %p382
    $region38: #{_lambda_.5} parent=5 // pred_check_branch
      %385 = sbr.rel (%p383) target = $region40
    $region39: #{_lambda_.5} parent=5 // pred_region
      %s386 = ssub.s32 %s9, 2
      // Predicated region
      $region41: #{_lambda_.5} parent=39 // pred_check
        %p387 = pneg %p130
      $region42: #{_lambda_.5} parent=39 // pred_check_branch
        %389 = sbr.rel (%p387) target = $region44
      $region43: #{_lambda_.5} parent=39 // pred_region
        %s390 = smul.u32 8, %s20
        %p391 = scmp.lt.s32.totalorder %s390, 15
        %s392 = scalar_select %p391, %s390, 15
        %p393 = scmp.lt.s32.totalorder %s21, 0
        %s394 = scalar_select %p393, %s21, 0
        %s395 = sadd.s32 %s394, %s392
        %s396 = smul.addr %s395, 4
        %s397 = scalar_lea.vmem %s3, %s396
      $region44: #{_lambda_.5} parent=39 // pred_fallthru
        _
    $region40: #{_lambda_.5} parent=5 // pred_fallthru
      _
  $region6: #{_lambda_.5} parent=0 // loop_footer
    %s13 = sadd.s32 1, %s9
  $region7: #{_lambda_.5} parent=0 // loop_footer_branch
    %8 = sbr.rel target = $region3
  $region8: #{_lambda_.5} parent=0 // loop_exit
    _

// kernel: _lambda_.6
$region0: #{_lambda_.6}
  #allocation0 [shape = 'u32[]', space=smem, size = 0x4, offset = 0x4, fixed_abs, tag = 'smem constant byte address 0x4 - core index']
  #allocation1 [shape = 'u32[72,128]{1,0:T(1,128)}', space=vmem, size = 0x9000, scoped, tag = 'internal scratch']
  %s0 = inlined_call_operand.vmem [shape: bf16[128,32], index: 0, kind: input, shape index: {}]
  %s1 = inlined_call_operand.vmem [shape: bf16[32,128], index: 1, kind: input, shape index: {}]
  %s2 = inlined_call_operand.vmem [shape: f32[1,128], index: 2, kind: input, shape index: {}]
  %s3 = inlined_call_operand.vmem [shape: bf16[128,128], index: 3, kind: output, shape index: {}]
  %s4 = sld [smem:[#allocation0]]
  $region45: #{_lambda_.6} parent=0
    _
  %s6 = ssub.s32 1, %s4
  %s7 = scalar_select 0, %s6, %s4
  loop: start=0, step=1, limit=4
  $region2: #{_lambda_.6} parent=0 // loop_pre_header
    _
  $region3: #{_lambda_.6} parent=0 // loop_header
    %s9 = sphi 0, %s13
    %p10 = scmp.ge.s32.totalorder %s9, 4
    %s16 = sphi 0, %s28
    %s17 = sphi 0, %s24
    %s18 = sphi 0, %s16
    %s19 = sphi 0, %s17
    %s20 = sphi 0, %s18
    %s21 = sphi 0, %s19
    %s31 = sphi 0, %s33
    %s34 = sphi 0, %s31
    %s35 = sphi 0, %s34
    %s51 = sphi 0, %s35
    %s57 = sphi 0, %s59
    %s60 = sphi 0, %s57
    %s61 = sphi 0, %s60
    %s77 = sphi 0, %s61
    %s83 = sphi 0, %s85
    %s86 = sphi 0, %s83
    %s87 = sphi 0, %s86
    %s103 = sphi 0, %s87
    %s111 = sphi 0, %s113
    %s114 = sphi 0, %s111
    %s115 = sphi 0, %s114
    %s131 = sphi 0, %s115
  $region4: #{_lambda_.6} parent=0 // loop_header_branch
    %12 = sbr.rel (%p10) target = $region8
  $region5: #{_lambda_.6} parent=0 // loop_body
    %s14 = ssub.s32 %s9, 1
    %s15 = ssub.s32 %s9, 2
    %s22 = sadd.s32 1, %s17
    %p23 = scmp.ge.s32.totalorder %s22, 1
    %s24 = scalar_select %p23, 0, %s22
    %s25 = sadd.s32 1, %s16
    %s26 = scalar_select %p23, %s25, %s16
    %p27 = scmp.ge.s32.totalorder %s26, 2
    %s28 = scalar_select %p27, 0, %s26
    %s29 = ssub.s32 %s16, %s28
    %p30 = scmp.eq.s32.totalorder %s29, 0
    %s32 = sadd.s32 %s31, 1
    %s33 = scalar_select %p30, %s31, %s32
    %p36 = pneg %p30
    %p37 = scmp.eq.s32.totalorder %s9, 1
    %p38 = por %p36, %p37
    %p39 = scmp.ne.s32.totalorder %s31, %s34
    %p40 = scmp.eq.s32.totalorder %s9, 0
    %p41 = por %p39, %p40
    %p42 = scmp.ne.s32.totalorder %s31, %s34
    %p43 = scmp.eq.s32.totalorder %s14, 1
    %p44 = por %p42, %p43
    %p45 = scmp.ne.s32.totalorder %s34, %s35
    %p46 = scmp.eq.s32.totalorder %s14, 0
    %p47 = por %p45, %p46
    %p48 = scmp.ne.s32.totalorder %s34, %s35
    %p49 = scmp.eq.s32.totalorder %s15, 1
    %p50 = por %p48, %p49
    %p52 = scmp.ne.s32.totalorder %s35, %s51
    %p53 = scmp.eq.s32.totalorder %s15, 0
    %p54 = por %p52, %p53
    %s55 = ssub.s32 %s17, %s24
    %p56 = scmp.eq.s32.totalorder %s55, 0
    %s58 = sadd.s32 %s57, 1
    %s59 = scalar_select %p56, %s57, %s58
    %p62 = pneg %p56
    %p63 = scmp.eq.s32.totalorder %s9, 1
    %p64 = por %p62, %p63
    %p65 = scmp.ne.s32.totalorder %s57, %s60
    %p66 = scmp.eq.s32.totalorder %s9, 0
    %p67 = por %p65, %p66
    %p68 = scmp.ne.s32.totalorder %s57, %s60
    %p69 = scmp.eq.s32.totalorder %s14, 1
    %p70 = por %p68, %p69
    %p71 = scmp.ne.s32.totalorder %s60, %s61
    %p72 = scmp.eq.s32.totalorder %s14, 0
    %p73 = por %p71, %p72
    %p74 = scmp.ne.s32.totalorder %s60, %s61
    %p75 = scmp.eq.s32.totalorder %s15, 1
    %p76 = por %p74, %p75
    %p78 = scmp.ne.s32.totalorder %s61, %s77
    %p79 = scmp.eq.s32.totalorder %s15, 0
    %p80 = por %p78, %p79
    %s81 = ssub.s32 %s17, %s24
    %p82 = scmp.eq.s32.totalorder %s81, 0
    %s84 = sadd.s32 %s83, 1
    %s85 = scalar_select %p82, %s83, %s84
    %p88 = pneg %p82
    %p89 = scmp.eq.s32.totalorder %s9, 1
    %p90 = por %p88, %p89
    %p91 = scmp.ne.s32.totalorder %s83, %s86
    %p92 = scmp.eq.s32.totalorder %s9, 0
    %p93 = por %p91, %p92
    %p94 = scmp.ne.s32.totalorder %s83, %s86
    %p95 = scmp.eq.s32.totalorder %s14, 1
    %p96 = por %p94, %p95
    %p97 = scmp.ne.s32.totalorder %s86, %s87
    %p98 = scmp.eq.s32.totalorder %s14, 0
    %p99 = por %p97, %p98
    %p100 = scmp.ne.s32.totalorder %s86, %s87
    %p101 = scmp.eq.s32.totalorder %s15, 1
    %p102 = por %p100, %p101
    %p104 = scmp.ne.s32.totalorder %s87, %s103
    %p105 = scmp.eq.s32.totalorder %s15, 0
    %p106 = por %p104, %p105
    %s107 = ssub.s32 %s16, %s28
    %s108 = ssub.s32 %s17, %s24
    %s109 = sor.u32 %s107, %s108
    %p110 = scmp.eq.s32.totalorder %s109, 0
    %s112 = sadd.s32 %s111, 1
    %s113 = scalar_select %p110, %s111, %s112
    %p116 = pneg %p110
    %p117 = scmp.eq.s32.totalorder %s9, 1
    %p118 = por %p116, %p117
    %p119 = scmp.ne.s32.totalorder %s111, %s114
    %p120 = scmp.eq.s32.totalorder %s9, 0
    %p121 = por %p119, %p120
    %p122 = scmp.ne.s32.totalorder %s111, %s114
    %p123 = scmp.eq.s32.totalorder %s14, 1
    %p124 = por %p122, %p123
    %p125 = scmp.ne.s32.totalorder %s114, %s115
    %p126 = scmp.eq.s32.totalorder %s14, 0
    %p127 = por %p125, %p126
    %p128 = scmp.ne.s32.totalorder %s114, %s115
    %p129 = scmp.eq.s32.totalorder %s15, 1
    %p130 = por %p128, %p129
    %p132 = scmp.ne.s32.totalorder %s115, %s131
    %p133 = scmp.eq.s32.totalorder %s15, 0
    %p134 = por %p132, %p133
    %p135 = scmp.le.s32.totalorder 1, %s9
    %p136 = scmp.lt.s32.totalorder %s9, 3
    %p137 = pnand %p135, %p136
    %p138 = pneg %p137
    // Predicated region
    $region9: #{_lambda_.6} parent=5 // pred_check
      _
    $region10: #{_lambda_.6} parent=5 // pred_check_branch
      %140 = sbr.rel (%p137) target = $region12
    $region11: #{_lambda_.6} parent=5 // pred_region
      %s141 = ssub.s32 %s9, 1
      // Predicated region
      $region13: #{_lambda_.6} parent=11 // pred_check
        %p142 = pneg %p73
      $region14: #{_lambda_.6} parent=11 // pred_check_branch
        %144 = sbr.rel (%p142) target = $region16
      $region15: #{_lambda_.6} parent=11 // pred_region
        %p145 = scmp.lt.s32.totalorder %s19, 0
        %s146 = scalar_select %p145, %s19, 0
        %s147 = smul.addr %s146, 4
        %s148 = scalar_lea.vmem %s1, %s147
      $region16: #{_lambda_.6} parent=11 // pred_fallthru
        _
      // Predicated region
      $region17: #{_lambda_.6} parent=11 // pred_check
        %p149 = pneg %p99
      $region18: #{_lambda_.6} parent=11 // pred_check_branch
        %151 = sbr.rel (%p149) target = $region20
      $region19: #{_lambda_.6} parent=11 // pred_region
        %p152 = scmp.lt.s32.totalorder %s19, 0
        %s153 = scalar_select %p152, %s19, 0
        %s154 = scalar_lea.vmem %s2, %s153
      $region20: #{_lambda_.6} parent=11 // pred_fallthru
        _
    $region12: #{_lambda_.6} parent=5 // pred_fallthru
      _
    %p155 = scmp.lt.s32.totalorder %s9, 2
    // Predicated region
    $region21: #{_lambda_.6} parent=5 // pred_check
      %p156 = pneg %p155
    $region22: #{_lambda_.6} parent=5 // pred_check_branch
      %158 = sbr.rel (%p156) target = $region24
    $region23: #{_lambda_.6} parent=5 // pred_region
      // Predicated region
      $region25: #{_lambda_.6} parent=23 // pred_check
        %p159 = pneg %p41
      $region26: #{_lambda_.6} parent=23 // pred_check_branch
        %161 = sbr.rel (%p159) target = $region28
      $region27: #{_lambda_.6} parent=23 // pred_region
        %s162 = smul.u32 8, %s16
        %p163 = scmp.lt.s32.totalorder %s162, 15
        %s164 = scalar_select %p163, %s162, 15
        %s165 = smul.addr %s164, 4
        %s166 = scalar_lea.vmem %s0, %s165
        %s167 = smul.u32 8, %s16
      $region28: #{_lambda_.6} parent=23 // pred_fallthru
        _
    $region24: #{_lambda_.6} parent=5 // pred_fallthru
      _
    %p168 = scmp.le.s32.totalorder 1, %s9
    %p169 = scmp.lt.s32.totalorder %s9, 3
    %p170 = pnand %p168, %p169
    %p171 = pneg %p170
    // Predicated region
    $region29: #{_lambda_.6} parent=5 // pred_check
      _
    $region30: #{_lambda_.6} parent=5 // pred_check_branch
      %173 = sbr.rel (%p170) target = $region32
    $region31: #{_lambda_.6} parent=5 // pred_region
      %s174 = ssub.s32 %s9, 1
      %s175 = smul.u32 8, %s18
      %p176 = scmp.lt.s32.totalorder %s175, 15
      %s177 = scalar_select %p176, %s175, 15
      %s178 = smul.addr %s177, 4
      %s179 = scalar_lea.vmem %s0, %s178
      %p180 = pneg %p47
      %p181 = pneg %p44
      %p182 = scmp.lt.s32.totalorder %s19, 0
      %s183 = scalar_select %p182, %s19, 0
      %s184 = smul.addr %s183, 4
      %s185 = scalar_lea.vmem %s1, %s184
      %p186 = pneg %p73
      %p187 = pneg %p70
      %p188 = scmp.lt.s32.totalorder %s19, 0
      %s189 = scalar_select %p188, %s19, 0
      %s190 = scalar_lea.vmem %s2, %s189
      %p191 = pneg %p99
      %p192 = pneg %p96
      %p193 = pneg %p127
      %p194 = pneg %p124
      %s195 = smul.u32 8, %s18
      %p196 = scmp.lt.s32.totalorder %s195, 15
      %s197 = scalar_select %p196, %s195, 15
      %p198 = scmp.lt.s32.totalorder %s19, 0
      %s199 = scalar_select %p198, %s19, 0
      %s200 = sadd.s32 %s199, %s197
      %s201 = smul.addr %s200, 4
      %s202 = scalar_lea.vmem %s3, %s201
      %s203 = smul.u32 8, %s18
      %p204 = scmp.lt.s32.totalorder %s203, 15
      %s205 = scalar_select %p204, %s203, 15
      %s206 = smul.addr %s205, 4
      %s207 = scalar_lea.vmem %s0, %s206
      %s208 = smul.u32 8, %s18
      %p209 = scmp.lt.s32.totalorder %s19, 0
      %s210 = scalar_select %p209, %s19, 0
      %s211 = smul.addr %s210, 4
      %s212 = scalar_lea.vmem %s1, %s211
      %p213 = scmp.lt.s32.totalorder %s19, 0
      %s214 = scalar_select %p213, %s19, 0
      %s215 = scalar_lea.vmem %s2, %s214
      %s216 = smul.u32 8, %s18
      %p217 = scmp.lt.s32.totalorder %s216, 15
      %s218 = scalar_select %p217, %s216, 15
      %p219 = scmp.lt.s32.totalorder %s19, 0
      %s220 = scalar_select %p219, %s19, 0
      %s221 = sadd.s32 %s220, %s218
      %s222 = smul.addr %s221, 4
      %s223 = scalar_lea.vmem %s3, %s222
      %s224 = smul.u32 8, %s18
      %v226 = vld [vmem:[%s207] sm:$0xf]
      %v227 = vld [vmem:[%s207 + $0x4] sm:$0xf]
      %v228 = vld [vmem:[%s207 + $0x8] sm:$0xf]
      %v229 = vld [vmem:[%s207 + $0xc] sm:$0xf]
      %v230 = vld [vmem:[%s207 + $0x10] sm:$0xf]
      %v231 = vld [vmem:[%s207 + $0x14] sm:$0xf]
      %v232 = vld [vmem:[%s207 + $0x18] sm:$0xf]
      %v233 = vld [vmem:[%s207 + $0x1c] sm:$0xf]
      %v234 = vunpack.c.l.bf16 %v226
      %v235 = vunpack.c.l.bf16 %v227
      %v236 = vunpack.c.l.bf16 %v228
      %v237 = vunpack.c.l.bf16 %v229
      %v238 = vunpack.c.l.bf16 %v230
      %v239 = vunpack.c.l.bf16 %v231
      %v240 = vunpack.c.l.bf16 %v232
      %v241 = vunpack.c.l.bf16 %v233
      %v242 = vmax.f32 %v234, 0.0
      %v243 = vmax.f32 %v235, 0.0
      %v244 = vmax.f32 %v236, 0.0
      %v245 = vmax.f32 %v237, 0.0
      %v246 = vmax.f32 %v238, 0.0
      %v247 = vmax.f32 %v239, 0.0
      %v248 = vmax.f32 %v240, 0.0
      %v249 = vmax.f32 %v241, 0.0
      %v250 = vpack.c.bf16 %v243, %v242
      %v251 = vpack.c.bf16 %v245, %v244
      %v252 = vpack.c.bf16 %v247, %v246
      %v253 = vpack.c.bf16 %v249, %v248
      %v254 = vld [vmem:[%s212] sm:$0xf]
      %v255 = vld [vmem:[%s212 + $0x4] sm:$0xf]
      %v256 = vld [vmem:[%s212 + $0x8] sm:$0xf]
      %v257 = vld [vmem:[%s212 + $0xc] sm:$0xf]
      %v258 = vld [vmem:[%s215] sm:$0x1]
      %v260 = vperm.slane %v258, 0
      %v266 = vunpack.c.l.b16 %v254
      %v267 = vunpack.c.l.b16 %v255
      %v268 = vunpack.c.l.b16 %v256
      %v269 = vunpack.c.l.b16 %v257
      %v270 = vpack.c.b16 %v267, %v266
      %v271 = vpack.c.b16 %v269, %v268
      %vm274 = vcmask 261120
      %v276 = vsel %vm274, %v250, 0
      %v279 = vsel %vm274, %v251, 0
      %v282 = vsel %vm274, %v252, 0
      %v285 = vsel %vm274, %v253, 0
      %287 = vmatpush.bf16.msra.mxu0 0
      %288 = vmatpush.bf16.msra.mxu0 0
      %289 = vmatpush.bf16.msra.mxu0 0
      %290 = vmatpush.bf16.msra.mxu0 0
      %291 = vmatpush.bf16.msra.mxu0 0
      %292 = vmatpush.bf16.msra.mxu0 0
      %293 = vmatpush.bf16.msra.mxu0 %v271
      %294 = vmatpush.bf16.msra.mxu0 %v270
      %295 = vmatmul.bf16.gmra.mxu0 %v276
      %v296 = vpop.f32.mrf.mxu0
      %v297 = vadd.f32 %v260, %v296
      %v298 = vpop.f32.mrf.mxu0
      %v299 = vadd.f32 %v260, %v298
      %300 = vmatmul.bf16.gmra.mxu0 %v279
      %v301 = vpop.f32.mrf.mxu0
      %v302 = vadd.f32 %v260, %v301
      %v303 = vpop.f32.mrf.mxu0
      %v304 = vadd.f32 %v260, %v303
      %305 = vmatmul.bf16.gmra.mxu0 %v282
      %v306 = vpop.f32.mrf.mxu0
      %v307 = vadd.f32 %v260, %v306
      %v308 = vpop.f32.mrf.mxu0
      %v309 = vadd.f32 %v260, %v308
      %310 = vmatmul.bf16.gmra.mxu0 %v285
      %v311 = vpop.f32.mrf.mxu0
      %v312 = vadd.f32 %v260, %v311
      %v313 = vpop.f32.mrf.mxu0
      %v314 = vadd.f32 %v260, %v313
      %315 = vdwg.mxu0
      %v316 = vpack.c.bf16 %v297, %v297
      %v317 = vpack.c.bf16 %v299, %v299
      %v318 = vpack.c.bf16 %v302, %v302
      %v319 = vpack.c.bf16 %v304, %v304
      %v320 = vpack.c.bf16 %v307, %v307
      %v321 = vpack.c.bf16 %v309, %v309
      %v322 = vpack.c.bf16 %v312, %v312
      %v323 = vpack.c.bf16 %v314, %v314
      %324 = vst [vmem:[%s223] sm:$0xf] %v316
      %325 = vst [vmem:[%s223 + $0x4] sm:$0xf] %v317
      %326 = vst [vmem:[%s223 + $0x8] sm:$0xf] %v318
      %327 = vst [vmem:[%s223 + $0xc] sm:$0xf] %v319
      %328 = vst [vmem:[%s223 + $0x10] sm:$0xf] %v320
      %329 = vst [vmem:[%s223 + $0x14] sm:$0xf] %v321
      %330 = vst [vmem:[%s223 + $0x18] sm:$0xf] %v322
      %331 = vst [vmem:[%s223 + $0x1c] sm:$0xf] %v323
      %s332 = smul.u32 8, %s18
      %p333 = scmp.lt.s32.totalorder %s332, 15
      %s334 = scalar_select %p333, %s332, 15
      %p335 = scmp.lt.s32.totalorder %s19, 0
      %s336 = scalar_select %p335, %s19, 0
      %s337 = sadd.s32 %s336, %s334
      %s338 = smul.addr %s337, 4
      %s339 = scalar_lea.vmem %s3, %s338
      // Predicated region
      $region33: #{_lambda_.6} parent=31 // pred_check
        %p340 = pneg %p124
      $region34: #{_lambda_.6} parent=31 // pred_check_branch
        %342 = sbr.rel (%p340) target = $region36
      $region35: #{_lambda_.6} parent=31 // pred_region
        %s343 = smul.u32 8, %s18
      $region36: #{_lambda_.6} parent=31 // pred_fallthru
        _
    $region32: #{_lambda_.6} parent=5 // pred_fallthru
      _
    %p344 = scmp.le.s32.totalorder 2, %s9
    // Predicated region
    $region37: #{_lambda_.6} parent=5 // pred_check
      %p345 = pneg %p344
    $region38: #{_lambda_.6} parent=5 // pred_check_branch
      %347 = sbr.rel (%p345) target = $region40
    $region39: #{_lambda_.6} parent=5 // pred_region
      %s348 = ssub.s32 %s9, 2
      // Predicated region
      $region41: #{_lambda_.6} parent=39 // pred_check
        %p349 = pneg %p130
      $region42: #{_lambda_.6} parent=39 // pred_check_branch
        %351 = sbr.rel (%p349) target = $region44
      $region43: #{_lambda_.6} parent=39 // pred_region
        %s352 = smul.u32 8, %s20
        %p353 = scmp.lt.s32.totalorder %s352, 15
        %s354 = scalar_select %p353, %s352, 15
        %p355 = scmp.lt.s32.totalorder %s21, 0
        %s356 = scalar_select %p355, %s21, 0
        %s357 = sadd.s32 %s356, %s354
        %s358 = smul.addr %s357, 4
        %s359 = scalar_lea.vmem %s3, %s358
      $region44: #{_lambda_.6} parent=39 // pred_fallthru
        _
    $region40: #{_lambda_.6} parent=5 // pred_fallthru
      _
  $region6: #{_lambda_.6} parent=0 // loop_footer
    %s13 = sadd.s32 1, %s9
  $region7: #{_lambda_.6} parent=0 // loop_footer_branch
    %8 = sbr.rel target = $region3
  $region8: #{_lambda_.6} parent=0 // loop_exit
    _

// kernel: _lambda_.7
$region0: #{_lambda_.7}
  #allocation0 [shape = 'u32[]', space=smem, size = 0x4, offset = 0x4, fixed_abs, tag = 'smem constant byte address 0x4 - core index']
  #allocation1 [shape = 'u32[72,128]{1,0:T(1,128)}', space=vmem, size = 0x9000, scoped, tag = 'internal scratch']
  %s0 = inlined_call_operand.vmem [shape: bf16[512,16], index: 0, kind: input, shape index: {}]
  %s1 = inlined_call_operand.vmem [shape: bf16[16,128], index: 1, kind: input, shape index: {}]
  %s2 = inlined_call_operand.vmem [shape: f32[1,128], index: 2, kind: input, shape index: {}]
  %s3 = inlined_call_operand.vmem [shape: bf16[512,128], index: 3, kind: output, shape index: {}]
  %s4 = sld [smem:[#allocation0]]
  $region45: #{_lambda_.7} parent=0
    _
  %s6 = ssub.s32 1, %s4
  %s7 = scalar_select 0, %s6, %s4
  loop: start=0, step=1, limit=4
  $region2: #{_lambda_.7} parent=0 // loop_pre_header
    _
  $region3: #{_lambda_.7} parent=0 // loop_header
    %s9 = sphi 0, %s13
    %p10 = scmp.ge.s32.totalorder %s9, 4
    %s16 = sphi 0, %s28
    %s17 = sphi 0, %s24
    %s18 = sphi 0, %s16
    %s19 = sphi 0, %s17
    %s20 = sphi 0, %s18
    %s21 = sphi 0, %s19
    %s31 = sphi 0, %s33
    %s34 = sphi 0, %s31
    %s35 = sphi 0, %s34
    %s51 = sphi 0, %s35
    %s57 = sphi 0, %s59
    %s60 = sphi 0, %s57
    %s61 = sphi 0, %s60
    %s77 = sphi 0, %s61
    %s83 = sphi 0, %s85
    %s86 = sphi 0, %s83
    %s87 = sphi 0, %s86
    %s103 = sphi 0, %s87
    %s111 = sphi 0, %s113
    %s114 = sphi 0, %s111
    %s115 = sphi 0, %s114
    %s131 = sphi 0, %s115
  $region4: #{_lambda_.7} parent=0 // loop_header_branch
    %12 = sbr.rel (%p10) target = $region8
  $region5: #{_lambda_.7} parent=0 // loop_body
    %s14 = ssub.s32 %s9, 1
    %s15 = ssub.s32 %s9, 2
    %s22 = sadd.s32 1, %s17
    %p23 = scmp.ge.s32.totalorder %s22, 1
    %s24 = scalar_select %p23, 0, %s22
    %s25 = sadd.s32 1, %s16
    %s26 = scalar_select %p23, %s25, %s16
    %p27 = scmp.ge.s32.totalorder %s26, 2
    %s28 = scalar_select %p27, 0, %s26
    %s29 = ssub.s32 %s16, %s28
    %p30 = scmp.eq.s32.totalorder %s29, 0
    %s32 = sadd.s32 %s31, 1
    %s33 = scalar_select %p30, %s31, %s32
    %p36 = pneg %p30
    %p37 = scmp.eq.s32.totalorder %s9, 1
    %p38 = por %p36, %p37
    %p39 = scmp.ne.s32.totalorder %s31, %s34
    %p40 = scmp.eq.s32.totalorder %s9, 0
    %p41 = por %p39, %p40
    %p42 = scmp.ne.s32.totalorder %s31, %s34
    %p43 = scmp.eq.s32.totalorder %s14, 1
    %p44 = por %p42, %p43
    %p45 = scmp.ne.s32.totalorder %s34, %s35
    %p46 = scmp.eq.s32.totalorder %s14, 0
    %p47 = por %p45, %p46
    %p48 = scmp.ne.s32.totalorder %s34, %s35
    %p49 = scmp.eq.s32.totalorder %s15, 1
    %p50 = por %p48, %p49
    %p52 = scmp.ne.s32.totalorder %s35, %s51
    %p53 = scmp.eq.s32.totalorder %s15, 0
    %p54 = por %p52, %p53
    %s55 = ssub.s32 %s17, %s24
    %p56 = scmp.eq.s32.totalorder %s55, 0
    %s58 = sadd.s32 %s57, 1
    %s59 = scalar_select %p56, %s57, %s58
    %p62 = pneg %p56
    %p63 = scmp.eq.s32.totalorder %s9, 1
    %p64 = por %p62, %p63
    %p65 = scmp.ne.s32.totalorder %s57, %s60
    %p66 = scmp.eq.s32.totalorder %s9, 0
    %p67 = por %p65, %p66
    %p68 = scmp.ne.s32.totalorder %s57, %s60
    %p69 = scmp.eq.s32.totalorder %s14, 1
    %p70 = por %p68, %p69
    %p71 = scmp.ne.s32.totalorder %s60, %s61
    %p72 = scmp.eq.s32.totalorder %s14, 0
    %p73 = por %p71, %p72
    %p74 = scmp.ne.s32.totalorder %s60, %s61
    %p75 = scmp.eq.s32.totalorder %s15, 1
    %p76 = por %p74, %p75
    %p78 = scmp.ne.s32.totalorder %s61, %s77
    %p79 = scmp.eq.s32.totalorder %s15, 0
    %p80 = por %p78, %p79
    %s81 = ssub.s32 %s17, %s24
    %p82 = scmp.eq.s32.totalorder %s81, 0
    %s84 = sadd.s32 %s83, 1
    %s85 = scalar_select %p82, %s83, %s84
    %p88 = pneg %p82
    %p89 = scmp.eq.s32.totalorder %s9, 1
    %p90 = por %p88, %p89
    %p91 = scmp.ne.s32.totalorder %s83, %s86
    %p92 = scmp.eq.s32.totalorder %s9, 0
    %p93 = por %p91, %p92
    %p94 = scmp.ne.s32.totalorder %s83, %s86
    %p95 = scmp.eq.s32.totalorder %s14, 1
    %p96 = por %p94, %p95
    %p97 = scmp.ne.s32.totalorder %s86, %s87
    %p98 = scmp.eq.s32.totalorder %s14, 0
    %p99 = por %p97, %p98
    %p100 = scmp.ne.s32.totalorder %s86, %s87
    %p101 = scmp.eq.s32.totalorder %s15, 1
    %p102 = por %p100, %p101
    %p104 = scmp.ne.s32.totalorder %s87, %s103
    %p105 = scmp.eq.s32.totalorder %s15, 0
    %p106 = por %p104, %p105
    %s107 = ssub.s32 %s16, %s28
    %s108 = ssub.s32 %s17, %s24
    %s109 = sor.u32 %s107, %s108
    %p110 = scmp.eq.s32.totalorder %s109, 0
    %s112 = sadd.s32 %s111, 1
    %s113 = scalar_select %p110, %s111, %s112
    %p116 = pneg %p110
    %p117 = scmp.eq.s32.totalorder %s9, 1
    %p118 = por %p116, %p117
    %p119 = scmp.ne.s32.totalorder %s111, %s114
    %p120 = scmp.eq.s32.totalorder %s9, 0
    %p121 = por %p119, %p120
    %p122 = scmp.ne.s32.totalorder %s111, %s114
    %p123 = scmp.eq.s32.totalorder %s14, 1
    %p124 = por %p122, %p123
    %p125 = scmp.ne.s32.totalorder %s114, %s115
    %p126 = scmp.eq.s32.totalorder %s14, 0
    %p127 = por %p125, %p126
    %p128 = scmp.ne.s32.totalorder %s114, %s115
    %p129 = scmp.eq.s32.totalorder %s15, 1
    %p130 = por %p128, %p129
    %p132 = scmp.ne.s32.totalorder %s115, %s131
    %p133 = scmp.eq.s32.totalorder %s15, 0
    %p134 = por %p132, %p133
    %p135 = scmp.le.s32.totalorder 1, %s9
    %p136 = scmp.lt.s32.totalorder %s9, 3
    %p137 = pnand %p135, %p136
    %p138 = pneg %p137
    // Predicated region
    $region9: #{_lambda_.7} parent=5 // pred_check
      _
    $region10: #{_lambda_.7} parent=5 // pred_check_branch
      %140 = sbr.rel (%p137) target = $region12
    $region11: #{_lambda_.7} parent=5 // pred_region
      %s141 = ssub.s32 %s9, 1
      // Predicated region
      $region13: #{_lambda_.7} parent=11 // pred_check
        %p142 = pneg %p73
      $region14: #{_lambda_.7} parent=11 // pred_check_branch
        %144 = sbr.rel (%p142) target = $region16
      $region15: #{_lambda_.7} parent=11 // pred_region
        %p145 = scmp.lt.s32.totalorder %s19, 0
        %s146 = scalar_select %p145, %s19, 0
        %s147 = smul.addr %s146, 4
        %s148 = scalar_lea.vmem %s1, %s147
      $region16: #{_lambda_.7} parent=11 // pred_fallthru
        _
      // Predicated region
      $region17: #{_lambda_.7} parent=11 // pred_check
        %p149 = pneg %p99
      $region18: #{_lambda_.7} parent=11 // pred_check_branch
        %151 = sbr.rel (%p149) target = $region20
      $region19: #{_lambda_.7} parent=11 // pred_region
        %p152 = scmp.lt.s32.totalorder %s19, 0
        %s153 = scalar_select %p152, %s19, 0
        %s154 = scalar_lea.vmem %s2, %s153
      $region20: #{_lambda_.7} parent=11 // pred_fallthru
        _
    $region12: #{_lambda_.7} parent=5 // pred_fallthru
      _
    %p155 = scmp.lt.s32.totalorder %s9, 2
    // Predicated region
    $region21: #{_lambda_.7} parent=5 // pred_check
      %p156 = pneg %p155
    $region22: #{_lambda_.7} parent=5 // pred_check_branch
      %158 = sbr.rel (%p156) target = $region24
    $region23: #{_lambda_.7} parent=5 // pred_region
      // Predicated region
      $region25: #{_lambda_.7} parent=23 // pred_check
        %p159 = pneg %p41
      $region26: #{_lambda_.7} parent=23 // pred_check_branch
        %161 = sbr.rel (%p159) target = $region28
      $region27: #{_lambda_.7} parent=23 // pred_region
        %s162 = smul.u32 32, %s16
        %p163 = scmp.lt.s32.totalorder %s162, 63
        %s164 = scalar_select %p163, %s162, 63
        %s165 = smul.addr %s164, 4
        %s166 = scalar_lea.vmem %s0, %s165
        %s167 = smul.u32 32, %s16
      $region28: #{_lambda_.7} parent=23 // pred_fallthru
        _
    $region24: #{_lambda_.7} parent=5 // pred_fallthru
      _
    %p168 = scmp.le.s32.totalorder 1, %s9
    %p169 = scmp.lt.s32.totalorder %s9, 3
    %p170 = pnand %p168, %p169
    %p171 = pneg %p170
    // Predicated region
    $region29: #{_lambda_.7} parent=5 // pred_check
      _
    $region30: #{_lambda_.7} parent=5 // pred_check_branch
      %173 = sbr.rel (%p170) target = $region32
    $region31: #{_lambda_.7} parent=5 // pred_region
      %s174 = ssub.s32 %s9, 1
      %s175 = smul.u32 32, %s18
      %p176 = scmp.lt.s32.totalorder %s175, 63
      %s177 = scalar_select %p176, %s175, 63
      %s178 = smul.addr %s177, 4
      %s179 = scalar_lea.vmem %s0, %s178
      %p180 = pneg %p47
      %p181 = pneg %p44
      %p182 = scmp.lt.s32.totalorder %s19, 0
      %s183 = scalar_select %p182, %s19, 0
      %s184 = smul.addr %s183, 4
      %s185 = scalar_lea.vmem %s1, %s184
      %p186 = pneg %p73
      %p187 = pneg %p70
      %p188 = scmp.lt.s32.totalorder %s19, 0
      %s189 = scalar_select %p188, %s19, 0
      %s190 = scalar_lea.vmem %s2, %s189
      %p191 = pneg %p99
      %p192 = pneg %p96
      %p193 = pneg %p127
      %p194 = pneg %p124
      %s195 = smul.u32 32, %s18
      %p196 = scmp.lt.s32.totalorder %s195, 63
      %s197 = scalar_select %p196, %s195, 63
      %p198 = scmp.lt.s32.totalorder %s19, 0
      %s199 = scalar_select %p198, %s19, 0
      %s200 = sadd.s32 %s199, %s197
      %s201 = smul.addr %s200, 4
      %s202 = scalar_lea.vmem %s3, %s201
      %s203 = smul.u32 32, %s18
      %p204 = scmp.lt.s32.totalorder %s203, 63
      %s205 = scalar_select %p204, %s203, 63
      %s206 = smul.addr %s205, 4
      %s207 = scalar_lea.vmem %s0, %s206
      %s208 = smul.u32 32, %s18
      %p209 = scmp.lt.s32.totalorder %s19, 0
      %s210 = scalar_select %p209, %s19, 0
      %s211 = smul.addr %s210, 4
      %s212 = scalar_lea.vmem %s1, %s211
      %p213 = scmp.lt.s32.totalorder %s19, 0
      %s214 = scalar_select %p213, %s19, 0
      %s215 = scalar_lea.vmem %s2, %s214
      %s216 = smul.u32 32, %s18
      %p217 = scmp.lt.s32.totalorder %s216, 63
      %s218 = scalar_select %p217, %s216, 63
      %p219 = scmp.lt.s32.totalorder %s19, 0
      %s220 = scalar_select %p219, %s19, 0
      %s221 = sadd.s32 %s220, %s218
      %s222 = smul.addr %s221, 4
      %s223 = scalar_lea.vmem %s3, %s222
      %s224 = smul.u32 32, %s18
      %v226 = vld [vmem:[%s207] sm:$0xf]
      %v227 = vld [vmem:[%s207 + $0x4] sm:$0xf]
      %v228 = vld [vmem:[%s207 + $0x8] sm:$0xf]
      %v229 = vld [vmem:[%s207 + $0xc] sm:$0xf]
      %v230 = vld [vmem:[%s207 + $0x10] sm:$0xf]
      %v231 = vld [vmem:[%s207 + $0x14] sm:$0xf]
      %v232 = vld [vmem:[%s207 + $0x18] sm:$0xf]
      %v233 = vld [vmem:[%s207 + $0x1c] sm:$0xf]
      %v234 = vld [vmem:[%s207 + $0x20] sm:$0xf]
      %v235 = vld [vmem:[%s207 + $0x24] sm:$0xf]
      %v236 = vld [vmem:[%s207 + $0x28] sm:$0xf]
      %v237 = vld [vmem:[%s207 + $0x2c] sm:$0xf]
      %v238 = vld [vmem:[%s207 + $0x30] sm:$0xf]
      %v239 = vld [vmem:[%s207 + $0x34] sm:$0xf]
      %v240 = vld [vmem:[%s207 + $0x38] sm:$0xf]
      %v241 = vld [vmem:[%s207 + $0x3c] sm:$0xf]
      %v242 = vld [vmem:[%s207 + $0x40] sm:$0xf]
      %v243 = vld [vmem:[%s207 + $0x44] sm:$0xf]
      %v244 = vld [vmem:[%s207 + $0x48] sm:$0xf]
      %v245 = vld [vmem:[%s207 + $0x4c] sm:$0xf]
      %v246 = vld [vmem:[%s207 + $0x50] sm:$0xf]
      %v247 = vld [vmem:[%s207 + $0x54] sm:$0xf]
      %v248 = vld [vmem:[%s207 + $0x58] sm:$0xf]
      %v249 = vld [vmem:[%s207 + $0x5c] sm:$0xf]
      %v250 = vld [vmem:[%s207 + $0x60] sm:$0xf]
      %v251 = vld [vmem:[%s207 + $0x64] sm:$0xf]
      %v252 = vld [vmem:[%s207 + $0x68] sm:$0xf]
      %v253 = vld [vmem:[%s207 + $0x6c] sm:$0xf]
      %v254 = vld [vmem:[%s207 + $0x70] sm:$0xf]
      %v255 = vld [vmem:[%s207 + $0x74] sm:$0xf]
      %v256 = vld [vmem:[%s207 + $0x78] sm:$0xf]
      %v257 = vld [vmem:[%s207 + $0x7c] sm:$0xf]
      %v258 = vunpack.c.l.bf16 %v226
      %v259 = vunpack.c.l.bf16 %v227
      %v260 = vunpack.c.l.bf16 %v228
      %v261 = vunpack.c.l.bf16 %v229
      %v262 = vunpack.c.l.bf16 %v230
      %v263 = vunpack.c.l.bf16 %v231
      %v264 = vunpack.c.l.bf16 %v232
      %v265 = vunpack.c.l.bf16 %v233
      %v266 = vunpack.c.l.bf16 %v234
      %v267 = vunpack.c.l.bf16 %v235
      %v268 = vunpack.c.l.bf16 %v236
      %v269 = vunpack.c.l.bf16 %v237
      %v270 = vunpack.c.l.bf16 %v238
      %v271 = vunpack.c.l.bf16 %v239
      %v272 = vunpack.c.l.bf16 %v240
      %v273 = vunpack.c.l.bf16 %v241
      %v274 = vunpack.c.l.bf16 %v242
      %v275 = vunpack.c.l.bf16 %v243
      %v276 = vunpack.c.l.bf16 %v244
      %v277 = vunpack.c.l.bf16 %v245
      %v278 = vunpack.c.l.bf16 %v246
      %v279 = vunpack.c.l.bf16 %v247
      %v280 = vunpack.c.l.bf16 %v248
      %v281 = vunpack.c.l.bf16 %v249
      %v282 = vunpack.c.l.bf16 %v250
      %v283 = vunpack.c.l.bf16 %v251
      %v284 = vunpack.c.l.bf16 %v252
      %v285 = vunpack.c.l.bf16 %v253
      %v286 = vunpack.c.l.bf16 %v254
      %v287 = vunpack.c.l.bf16 %v255
      %v288 = vunpack.c.l.bf16 %v256
      %v289 = vunpack.c.l.bf16 %v257
      %v290 = vmax.f32 %v258, 0.0
      %v291 = vmax.f32 %v259, 0.0
      %v292 = vmax.f32 %v260, 0.0
      %v293 = vmax.f32 %v261, 0.0
      %v294 = vmax.f32 %v262, 0.0
      %v295 = vmax.f32 %v263, 0.0
      %v296 = vmax.f32 %v264, 0.0
      %v297 = vmax.f32 %v265, 0.0
      %v298 = vmax.f32 %v266, 0.0
      %v299 = vmax.f32 %v267, 0.0
      %v300 = vmax.f32 %v268, 0.0
      %v301 = vmax.f32 %v269, 0.0
      %v302 = vmax.f32 %v270, 0.0
      %v303 = vmax.f32 %v271, 0.0
      %v304 = vmax.f32 %v272, 0.0
      %v305 = vmax.f32 %v273, 0.0
      %v306 = vmax.f32 %v274, 0.0
      %v307 = vmax.f32 %v275, 0.0
      %v308 = vmax.f32 %v276, 0.0
      %v309 = vmax.f32 %v277, 0.0
      %v310 = vmax.f32 %v278, 0.0
      %v311 = vmax.f32 %v279, 0.0
      %v312 = vmax.f32 %v280, 0.0
      %v313 = vmax.f32 %v281, 0.0
      %v314 = vmax.f32 %v282, 0.0
      %v315 = vmax.f32 %v283, 0.0
      %v316 = vmax.f32 %v284, 0.0
      %v317 = vmax.f32 %v285, 0.0
      %v318 = vmax.f32 %v286, 0.0
      %v319 = vmax.f32 %v287, 0.0
      %v320 = vmax.f32 %v288, 0.0
      %v321 = vmax.f32 %v289, 0.0
      %v322 = vpack.c.bf16 %v291, %v290
      %v323 = vpack.c.bf16 %v293, %v292
      %v324 = vpack.c.bf16 %v295, %v294
      %v325 = vpack.c.bf16 %v297, %v296
      %v326 = vpack.c.bf16 %v299, %v298
      %v327 = vpack.c.bf16 %v301, %v300
      %v328 = vpack.c.bf16 %v303, %v302
      %v329 = vpack.c.bf16 %v305, %v304
      %v330 = vpack.c.bf16 %v307, %v306
      %v331 = vpack.c.bf16 %v309, %v308
      %v332 = vpack.c.bf16 %v311, %v310
      %v333 = vpack.c.bf16 %v313, %v312
      %v334 = vpack.c.bf16 %v315, %v314
      %v335 = vpack.c.bf16 %v317, %v316
      %v336 = vpack.c.bf16 %v319, %v318
      %v337 = vpack.c.bf16 %v321, %v320
      %v338 = vld [vmem:[%s212] sm:$0xf]
      %v339 = vld [vmem:[%s212 + $0x4] sm:$0xf]
      %v340 = vld [vmem:[%s215] sm:$0x1]
      %v342 = vperm.slane %v340, 0
      %v346 = vunpack.c.l.b16 %v338
      %v347 = vunpack.c.l.b16 %v339
      %v348 = vpack.c.b16 %v347, %v346
      %vm350 = vcmask 130048
      %v352 = vsel %vm350, %v322, 0
      %v355 = vsel %vm350, %v323, 0
      %v358 = vsel %vm350, %v324, 0
      %v361 = vsel %vm350, %v325, 0
      %v364 = vsel %vm350, %v326, 0
      %v367 = vsel %vm350, %v327, 0
      %v370 = vsel %vm350, %v328, 0
      %v373 = vsel %vm350, %v329, 0
      %v376 = vsel %vm350, %v330, 0
      %v379 = vsel %vm350, %v331, 0
      %v382 = vsel %vm350, %v332, 0
      %v385 = vsel %vm350, %v333, 0
      %v388 = vsel %vm350, %v334, 0
      %v391 = vsel %vm350, %v335, 0
      %v394 = vsel %vm350, %v336, 0
      %v397 = vsel %vm350, %v337, 0
      %399 = vmatpush.bf16.msra.mxu0 0
      %400 = vmatpush.bf16.msra.mxu0 0
      %401 = vmatpush.bf16.msra.mxu0 0
      %402 = vmatpush.bf16.msra.mxu0 0
      %403 = vmatpush.bf16.msra.mxu0 0
      %404 = vmatpush.bf16.msra.mxu0 0
      %405 = vmatpush.bf16.msra.mxu0 0
      %406 = vmatpush.bf16.msra.mxu0 %v348
      %407 = vmatmul.bf16.gmra.mxu0 %v352
      %v408 = vpop.f32.mrf.mxu0
      %v409 = vadd.f32 %v342, %v408
      %v410 = vpop.f32.mrf.mxu0
      %v411 = vadd.f32 %v342, %v410
      %412 = vmatmul.bf16.gmra.mxu0 %v355
      %v413 = vpop.f32.mrf.mxu0
      %v414 = vadd.f32 %v342, %v413
      %v415 = vpop.f32.mrf.mxu0
      %v416 = vadd.f32 %v342, %v415
      %417 = vmatmul.bf16.gmra.mxu0 %v358
      %v418 = vpop.f32.mrf.mxu0
      %v419 = vadd.f32 %v342, %v418
      %v420 = vpop.f32.mrf.mxu0
      %v421 = vadd.f32 %v342, %v420
      %422 = vmatmul.bf16.gmra.mxu0 %v361
      %v423 = vpop.f32.mrf.mxu0
      %v424 = vadd.f32 %v342, %v423
      %v425 = vpop.f32.mrf.mxu0
      %v426 = vadd.f32 %v342, %v425
      %427 = vmatmul.bf16.gmra.mxu0 %v364
      %v428 = vpop.f32.mrf.mxu0
      %v429 = vadd.f32 %v342, %v428
      %v430 = vpop.f32.mrf.mxu0
      %v431 = vadd.f32 %v342, %v430
      %432 = vmatmul.bf16.gmra.mxu0 %v367
      %v433 = vpop.f32.mrf.mxu0
      %v434 = vadd.f32 %v342, %v433
      %v435 = vpop.f32.mrf.mxu0
      %v436 = vadd.f32 %v342, %v435
      %437 = vmatmul.bf16.gmra.mxu0 %v370
      %v438 = vpop.f32.mrf.mxu0
      %v439 = vadd.f32 %v342, %v438
      %v440 = vpop.f32.mrf.mxu0
      %v441 = vadd.f32 %v342, %v440
      %442 = vmatmul.bf16.gmra.mxu0 %v373
      %v443 = vpop.f32.mrf.mxu0
      %v444 = vadd.f32 %v342, %v443
      %v445 = vpop.f32.mrf.mxu0
      %v446 = vadd.f32 %v342, %v445
      %447 = vmatmul.bf16.gmra.mxu0 %v376
      %v448 = vpop.f32.mrf.mxu0
      %v449 = vadd.f32 %v342, %v448
      %v450 = vpop.f32.mrf.mxu0
      %v451 = vadd.f32 %v342, %v450
      %452 = vmatmul.bf16.gmra.mxu0 %v379
      %v453 = vpop.f32.mrf.mxu0
      %v454 = vadd.f32 %v342, %v453
      %v455 = vpop.f32.mrf.mxu0
      %v456 = vadd.f32 %v342, %v455
      %457 = vmatmul.bf16.gmra.mxu0 %v382
      %v458 = vpop.f32.mrf.mxu0
      %v459 = vadd.f32 %v342, %v458
      %v460 = vpop.f32.mrf.mxu0
      %v461 = vadd.f32 %v342, %v460
      %462 = vmatmul.bf16.gmra.mxu0 %v385
      %v463 = vpop.f32.mrf.mxu0
      %v464 = vadd.f32 %v342, %v463
      %v465 = vpop.f32.mrf.mxu0
      %v466 = vadd.f32 %v342, %v465
      %467 = vmatmul.bf16.gmra.mxu0 %v388
      %v468 = vpop.f32.mrf.mxu0
      %v469 = vadd.f32 %v342, %v468
      %v470 = vpop.f32.mrf.mxu0
      %v471 = vadd.f32 %v342, %v470
      %472 = vmatmul.bf16.gmra.mxu0 %v391
      %v473 = vpop.f32.mrf.mxu0
      %v474 = vadd.f32 %v342, %v473
      %v475 = vpop.f32.mrf.mxu0
      %v476 = vadd.f32 %v342, %v475
      %477 = vmatmul.bf16.gmra.mxu0 %v394
      %v478 = vpop.f32.mrf.mxu0
      %v479 = vadd.f32 %v342, %v478
      %v480 = vpop.f32.mrf.mxu0
      %v481 = vadd.f32 %v342, %v480
      %482 = vmatmul.bf16.gmra.mxu0 %v397
      %v483 = vpop.f32.mrf.mxu0
      %v484 = vadd.f32 %v342, %v483
      %v485 = vpop.f32.mrf.mxu0
      %v486 = vadd.f32 %v342, %v485
      %487 = vdwg.mxu0
      %v488 = vpack.c.bf16 %v409, %v409
      %v489 = vpack.c.bf16 %v411, %v411
      %v490 = vpack.c.bf16 %v414, %v414
      %v491 = vpack.c.bf16 %v416, %v416
      %v492 = vpack.c.bf16 %v419, %v419
      %v493 = vpack.c.bf16 %v421, %v421
      %v494 = vpack.c.bf16 %v424, %v424
      %v495 = vpack.c.bf16 %v426, %v426
      %v496 = vpack.c.bf16 %v429, %v429
      %v497 = vpack.c.bf16 %v431, %v431
      %v498 = vpack.c.bf16 %v434, %v434
      %v499 = vpack.c.bf16 %v436, %v436
      %v500 = vpack.c.bf16 %v439, %v439
      %v501 = vpack.c.bf16 %v441, %v441
      %v502 = vpack.c.bf16 %v444, %v444
      %v503 = vpack.c.bf16 %v446, %v446
      %v504 = vpack.c.bf16 %v449, %v449
      %v505 = vpack.c.bf16 %v451, %v451
      %v506 = vpack.c.bf16 %v454, %v454
      %v507 = vpack.c.bf16 %v456, %v456
      %v508 = vpack.c.bf16 %v459, %v459
      %v509 = vpack.c.bf16 %v461, %v461
      %v510 = vpack.c.bf16 %v464, %v464
      %v511 = vpack.c.bf16 %v466, %v466
      %v512 = vpack.c.bf16 %v469, %v469
      %v513 = vpack.c.bf16 %v471, %v471
      %v514 = vpack.c.bf16 %v474, %v474
      %v515 = vpack.c.bf16 %v476, %v476
      %v516 = vpack.c.bf16 %v479, %v479
      %v517 = vpack.c.bf16 %v481, %v481
      %v518 = vpack.c.bf16 %v484, %v484
      %v519 = vpack.c.bf16 %v486, %v486
      %520 = vst [vmem:[%s223] sm:$0xf] %v488
      %521 = vst [vmem:[%s223 + $0x4] sm:$0xf] %v489
      %522 = vst [vmem:[%s223 + $0x8] sm:$0xf] %v490
      %523 = vst [vmem:[%s223 + $0xc] sm:$0xf] %v491
      %524 = vst [vmem:[%s223 + $0x10] sm:$0xf] %v492
      %525 = vst [vmem:[%s223 + $0x14] sm:$0xf] %v493
      %526 = vst [vmem:[%s223 + $0x18] sm:$0xf] %v494
      %527 = vst [vmem:[%s223 + $0x1c] sm:$0xf] %v495
      %528 = vst [vmem:[%s223 + $0x20] sm:$0xf] %v496
      %529 = vst [vmem:[%s223 + $0x24] sm:$0xf] %v497
      %530 = vst [vmem:[%s223 + $0x28] sm:$0xf] %v498
      %531 = vst [vmem:[%s223 + $0x2c] sm:$0xf] %v499
      %532 = vst [vmem:[%s223 + $0x30] sm:$0xf] %v500
      %533 = vst [vmem:[%s223 + $0x34] sm:$0xf] %v501
      %534 = vst [vmem:[%s223 + $0x38] sm:$0xf] %v502
      %535 = vst [vmem:[%s223 + $0x3c] sm:$0xf] %v503
      %536 = vst [vmem:[%s223 + $0x40] sm:$0xf] %v504
      %537 = vst [vmem:[%s223 + $0x44] sm:$0xf] %v505
      %538 = vst [vmem:[%s223 + $0x48] sm:$0xf] %v506
      %539 = vst [vmem:[%s223 + $0x4c] sm:$0xf] %v507
      %540 = vst [vmem:[%s223 + $0x50] sm:$0xf] %v508
      %541 = vst [vmem:[%s223 + $0x54] sm:$0xf] %v509
      %542 = vst [vmem:[%s223 + $0x58] sm:$0xf] %v510
      %543 = vst [vmem:[%s223 + $0x5c] sm:$0xf] %v511
      %544 = vst [vmem:[%s223 + $0x60] sm:$0xf] %v512
      %545 = vst [vmem:[%s223 + $0x64] sm:$0xf] %v513
      %546 = vst [vmem:[%s223 + $0x68] sm:$0xf] %v514
      %547 = vst [vmem:[%s223 + $0x6c] sm:$0xf] %v515
      %548 = vst [vmem:[%s223 + $0x70] sm:$0xf] %v516
      %549 = vst [vmem:[%s223 + $0x74] sm:$0xf] %v517
      %550 = vst [vmem:[%s223 + $0x78] sm:$0xf] %v518
      %551 = vst [vmem:[%s223 + $0x7c] sm:$0xf] %v519
      %s552 = smul.u32 32, %s18
      %p553 = scmp.lt.s32.totalorder %s552, 63
      %s554 = scalar_select %p553, %s552, 63
      %p555 = scmp.lt.s32.totalorder %s19, 0
      %s556 = scalar_select %p555, %s19, 0
      %s557 = sadd.s32 %s556, %s554
      %s558 = smul.addr %s557, 4
      %s559 = scalar_lea.vmem %s3, %s558
      // Predicated region
      $region33: #{_lambda_.7} parent=31 // pred_check
        %p560 = pneg %p124
      $region34: #{_lambda_.7} parent=31 // pred_check_branch
        %562 = sbr.rel (%p560) target = $region36
      $region35: #{_lambda_.7} parent=31 // pred_region
        %s563 = smul.u32 32, %s18
      $region36: #{_lambda_.7} parent=31 // pred_fallthru
        _
    $region32: #{_lambda_.7} parent=5 // pred_fallthru
      _
    %p564 = scmp.le.s32.totalorder 2, %s9
    // Predicated region
    $region37: #{_lambda_.7} parent=5 // pred_check
      %p565 = pneg %p564
    $region38: #{_lambda_.7} parent=5 // pred_check_branch
      %567 = sbr.rel (%p565) target = $region40
    $region39: #{_lambda_.7} parent=5 // pred_region
      %s568 = ssub.s32 %s9, 2
      // Predicated region
      $region41: #{_lambda_.7} parent=39 // pred_check
        %p569 = pneg %p130
      $region42: #{_lambda_.7} parent=39 // pred_check_branch
        %571 = sbr.rel (%p569) target = $region44
      $region43: #{_lambda_.7} parent=39 // pred_region
        %s572 = smul.u32 32, %s20
        %p573 = scmp.lt.s32.totalorder %s572, 63
        %s574 = scalar_select %p573, %s572, 63
        %p575 = scmp.lt.s32.totalorder %s21, 0
        %s576 = scalar_select %p575, %s21, 0
        %s577 = sadd.s32 %s576, %s574
        %s578 = smul.addr %s577, 4
        %s579 = scalar_lea.vmem %s3, %s578
      $region44: #{_lambda_.7} parent=39 // pred_fallthru
        _
    $region40: #{_lambda_.7} parent=5 // pred_fallthru
      _
  $region6: #{_lambda_.7} parent=0 // loop_footer
    %s13 = sadd.s32 1, %s9
  $region7: #{_lambda_.7} parent=0 // loop_footer_branch
    %8 = sbr.rel target = $region3
  $region8: #{_lambda_.7} parent=0 // loop_exit
    _

</llo_original>
